<compile_context>
chip_gen: v7x
topology: tpu7x:2x2x1
jax: 0.10.0
libtpu: 0.0.40
codegen_flags: <defaults>
</compile_context>

<pallas_src>
import functools

import jax
import jax.numpy as jnp
from jax import lax
from jax.experimental import pallas as pl
from jax.experimental.pallas import tpu as pltpu


def _gru_head_kernel(ids_ref, emb_ref, wih_ref, whh_ref, bih_ref, bhhn_ref,
                     wout_ref, bout_ref, out_ref, gi_ref,
                     *, n_steps, b_p, hid_p, vocab_p):
    """Whole sequence in one gridless kernel invocation.

    ids_ref  : (T*B_p, 1) int32    time-major flattened token ids (row = t*B_p + b)
    emb_ref  : (vocab_p, inp)      zero-padded embedding table
    gi_ref   : (T*B_p, 3*hid_p)    VMEM scratch: hoisted input projection (+ folded biases)
    out_ref  : (B_p, out_p)        logits of the Linear head on the final hidden state
    """
    rows = n_steps * b_p

    # (1) In-kernel embedding lookup as a one-hot MXU GEMM (vocab is tiny here), fused
    #     into the hoisted input-projection GEMM for ALL timesteps at once.
    # TODO(synk): for large vocab, replace the one-hot GEMM with a scalar-prefetch-driven
    #             DMA row gather from an HBM-resident table.
    onehot = (ids_ref[...] ==
              lax.broadcasted_iota(jnp.int32, (rows, vocab_p), 1)).astype(jnp.float32)
    emb = jnp.dot(onehot, emb_ref[...], preferred_element_type=jnp.float32)
    gi_ref[...] = (jnp.dot(emb, wih_ref[...], preferred_element_type=jnp.float32)
                   + bih_ref[...])        # bias = b_ih + [b_hh_r | b_hh_z | 0] (pre-folded)

    # Loop-invariant operands loaded once; n-gate recurrent bias broadcast hoisted so the
    # (fully unrolled) loop does not re-emit T broadcasts.
    whh = whh_ref[...]
    bhh_n = jnp.broadcast_to(bhhn_ref[...], (b_p, hid_p))

    # TODO(synk): on v6e/v7x, W_hh could be held staged in the MXU across all T steps via
    #             pltpu.matmul_push_rhs / matmul_acc_lhs / matmul_pop (constant RHS, 8-row
    #             LHS); skipped here to keep lowering on the well-trodden jnp.dot path.
    def step(t, h):
        row = pl.multiple_of(t * b_p, b_p)
        gi = gi_ref[pl.ds(row, b_p), :]                            # (B_p, 3*hid_p)
        gh = jnp.dot(h, whh, preferred_element_type=jnp.float32)   # r/z biases already in gi
        # Gate blocks [r | z | n]; hid_p is a multiple of 128 -> lane-aligned slices.
        i_r, i_z, i_n = gi[:, :hid_p], gi[:, hid_p:2 * hid_p], gi[:, 2 * hid_p:]
        h_r, h_z, h_n = gh[:, :hid_p], gh[:, hid_p:2 * hid_p], gh[:, 2 * hid_p:]
        r = jax.nn.sigmoid(i_r + h_r)
        z = jax.nn.sigmoid(i_z + h_z)
        n = jnp.tanh(i_n + r * (h_n + bhh_n))      # n-gate bias must stay inside (scaled by r)
        return n + z * (h - n)                     # == (1 - z) * n + z * h

    h0 = jnp.zeros((b_p, hid_p), jnp.float32)      # torch.nn.GRU zero initial state
    h_n = lax.fori_loop(0, n_steps, step, h0,
                        unroll=(True if n_steps <= 32 else 8))

    # Linear head on the final hidden state; (B_p, out_p) is a lane-dense (unmasked) store.
    out_ref[...] = (jnp.dot(h_n, wout_ref[...], preferred_element_type=jnp.float32)
                    + bout_ref[...])


def _round_up(n, m):
    return (n + m - 1) // m * m


def _pad_axis(a, axis, new_size):
    pad = [(0, 0)] * a.ndim
    pad[axis] = (0, new_size - a.shape[axis])
    return jnp.pad(a, pad)


def _repack_gates(w, hid, hid_p):
    """Last dim packed [r|z|n] with width `hid` each -> width `hid_p` each (zero pad)."""
    gates = [w[..., g * hid:(g + 1) * hid] for g in range(3)]
    return jnp.concatenate([_pad_axis(g, -1, hid_p) for g in gates], axis=-1)


def rnn_forward(x, params):
    """x: (B, T) int32 token ids.  Returns logits (B, out)."""
    emb_table = params["embedding"]                    # (vocab, inp)
    w_ih, w_hh = params["w_ih"], params["w_hh"]        # (inp, 3*hid), (hid, 3*hid)
    b_ih, b_hh = params["b_ih"], params["b_hh"]        # (1, 3*hid)
    w_out, b_out = params["w_out"], params["b_out"]    # (hid, out), (1, out)

    B, T = x.shape
    vocab, inp = emb_table.shape
    hid = w_hh.shape[0]
    out = w_out.shape[1]

    B_p = _round_up(B, 8)            # sublane-dense batch
    hid_p = _round_up(hid, 128)      # lane-aligned gate blocks
    out_p = _round_up(out, 128)      # lane-dense output store
    vocab_p = _round_up(vocab, 128)  # lane-aligned one-hot columns

    # --- parameter prep (numerically inert zero padding) -----------------------------
    emb_p = _pad_axis(emb_table, 0, vocab_p)                          # (vocab_p, inp)
    w_ih_p = _repack_gates(w_ih, hid, hid_p)                          # (inp, 3*hid_p)
    w_hh_p = _pad_axis(_repack_gates(w_hh, hid, hid_p), 0, hid_p)     # (hid_p, 3*hid_p)
    b_ih_p = _repack_gates(b_ih, hid, hid_p)                          # (1, 3*hid_p)
    b_hh_p = _repack_gates(b_hh, hid, hid_p)                          # (1, 3*hid_p)
    # Fold the r/z slices of b_hh into the hoisted input-projection bias; keep only the
    # n-gate slice of b_hh on the serial path (it is multiplied by r, cannot be folded).
    b_ih_eff = b_ih_p.at[:, :2 * hid_p].add(b_hh_p[:, :2 * hid_p])    # (1, 3*hid_p)
    b_hh_n = b_hh_p[:, 2 * hid_p:]                                    # (1, hid_p)
    w_out_p = _pad_axis(_pad_axis(w_out, 0, hid_p), 1, out_p)         # (hid_p, out_p)
    b_out_p = _pad_axis(b_out, 1, out_p)                              # (1, out_p)

    # Time-major flattened ids (row = t*B_p + b).  Only this tiny int32 array is touched
    # on the host; the embedding activations never leave the kernel.
    x_p = jnp.pad(x, ((0, B_p - B), (0, 0)))            # padded rows reuse token id 0
    ids_tm = jnp.transpose(x_p, (1, 0)).reshape(T * B_p, 1).astype(jnp.int32)

    # --- VMEM budget (single-buffered full-array residency, no grid) ------------------
    gi_bytes = T * B_p * 3 * hid_p * 4
    in_bytes = 4 * (ids_tm.size + emb_p.size + w_ih_p.size + w_hh_p.size
                    + b_ih_eff.size + b_hh_n.size + w_out_p.size + b_out_p.size)
    out_bytes = B_p * out_p * 4
    vmem_limit = int(min(max(2 * (gi_bytes + in_bytes + out_bytes), 32 << 20), 48 << 20))
    # TODO(synk): the gi scratch grows as T*B_p*3*hid_p*4; past ~half of v7x's 64 MiB VMEM,
    #             switch to a time-chunked grid ("arbitrary") with h carried in persistent
    #             VMEM scratch, and (if B_p >= 16) add a leading "parallel" batch axis to
    #             use both v7x TensorCores; bf16 weight operands (f32 accumulate) would
    #             further halve weight VMEM on v6e/v7x.

    vmem_spec = pl.BlockSpec(memory_space=pltpu.MemorySpace.VMEM)
    kernel = functools.partial(_gru_head_kernel, n_steps=T, b_p=B_p,
                               hid_p=hid_p, vocab_p=vocab_p)

    logits_p = pl.pallas_call(
        kernel,
        out_shape=jax.ShapeDtypeStruct((B_p, out_p), jnp.float32),
        in_specs=[vmem_spec] * 8,
        out_specs=vmem_spec,
        scratch_shapes=[pltpu.VMEM((T * B_p, 3 * hid_p), jnp.float32)],  # hoisted gi
        compiler_params=pltpu.CompilerParams(vmem_limit_bytes=vmem_limit),
    )(ids_tm, emb_p, w_ih_p, w_hh_p, b_ih_eff, b_hh_n, w_out_p, b_out_p)

    return logits_p[:B, :out]


def rnn_forward_ref(x, params):
    """Pure-JAX reference (lax.scan GRU, unpadded) for correctness checking."""
    emb = jnp.take(params["embedding"], x, axis=0)   # (B, T, inp)
    hid = params["w_hh"].shape[0]

    def step(h, x_t):
        gi = x_t @ params["w_ih"] + params["b_ih"]
        gh = h @ params["w_hh"] + params["b_hh"]
        i_r, i_z, i_n = gi[:, :hid], gi[:, hid:2 * hid], gi[:, 2 * hid:]
        h_r, h_z, h_n = gh[:, :hid], gh[:, hid:2 * hid], gh[:, 2 * hid:]
        r = jax.nn.sigmoid(i_r + h_r)
        z = jax.nn.sigmoid(i_z + h_z)
        n = jnp.tanh(i_n + r * h_n)
        h_new = (1.0 - z) * n + z * h
        return h_new, None

    h0 = jnp.zeros((x.shape[0], hid), jnp.float32)
    h_n, _ = jax.lax.scan(step, h0, jnp.transpose(emb, (1, 0, 2)))
    return h_n @ params["w_out"] + params["b_out"]


def init_params(key, vocab_size, inp, hid, out):
    ks = jax.random.split(key, 8)
    s = 1.0 / jnp.sqrt(hid)
    xav = jnp.sqrt(6.0 / (hid + out))
    return {
        # nn.Embedding: N(0, 1)
        "embedding": jax.random.normal(ks[0], (vocab_size, inp), jnp.float32),
        # nn.GRU weights: U(-1/sqrt(hid), 1/sqrt(hid)); stored transposed, gates packed
        # [r | z | n] like PyTorch weight_ih_l0 / weight_hh_l0.
        "w_ih": jax.random.uniform(ks[1], (inp, 3 * hid), jnp.float32, -s, s),
        "w_hh": jax.random.uniform(ks[2], (hid, 3 * hid), jnp.float32, -s, s),
        "b_ih": jax.random.uniform(ks[3], (1, 3 * hid), jnp.float32, -s, s),
        "b_hh": jax.random.uniform(ks[4], (1, 3 * hid), jnp.float32, -s, s),
        # nn.Linear(hid, out) with xavier_uniform_ weight
        "w_out": jax.random.uniform(ks[5], (hid, out), jnp.float32, -xav, xav),
        "b_out": jax.random.uniform(ks[6], (1, out), jnp.float32, -s, s),
    }


if __name__ == "__main__":
    vocab_size, inp, hid, out = 50, 16, 32, 4
    B, T = 2, 8

    key = jax.random.PRNGKey(0)
    k_param, k_x = jax.random.split(key)
    params = init_params(k_param, vocab_size, inp, hid, out)
    x = jax.random.randint(k_x, (B, T), 0, vocab_size, dtype=jnp.int32)

    logits = jax.block_until_ready(rnn_forward(x, params))
    ref = jax.block_until_ready(rnn_forward_ref(x, params))

    assert logits.shape == (B, out), logits.shape
    assert jnp.allclose(logits, ref, atol=1e-4, rtol=1e-4), (
        f"mismatch: max abs err {jnp.max(jnp.abs(logits - ref))}")
    print("KERNEL_OK")
</pallas_src>

<mosaic_0001>
module attributes {stable_mosaic.version = 11 : i64} {
  func.func @_gru_head_kernel(%arg0: memref<64x1xi32, #tpu.memory_space<vmem>>, %arg1: memref<128x16xf32, #tpu.memory_space<vmem>>, %arg2: memref<16x384xf32, #tpu.memory_space<vmem>>, %arg3: memref<128x384xf32, #tpu.memory_space<vmem>>, %arg4: memref<1x384xf32, #tpu.memory_space<vmem>>, %arg5: memref<1x128xf32, #tpu.memory_space<vmem>>, %arg6: memref<128x128xf32, #tpu.memory_space<vmem>>, %arg7: memref<1x128xf32, #tpu.memory_space<vmem>>, %arg8: memref<8x128xf32, #tpu.memory_space<vmem>>, %arg9: memref<64x384xf32, #tpu.memory_space<vmem>>) attributes {dimension_semantics = [], scalar_prefetch = 0 : i64, scratch_operands = 1 : i64, tpu.core_type = #tpu.core_type<tc>} {
    %c0 = arith.constant 0 : index
    %c0_0 = arith.constant 0 : index
    %0 = vector.load %arg0[%c0, %c0_0] : memref<64x1xi32, #tpu.memory_space<vmem>>, vector<64x1xi32>
    %1 = tpu.iota {dimensions = array<i32: 1>} : vector<64x128xi32>
    %2 = vector.broadcast %0 : vector<64x1xi32> to vector<64x128xi32>
    %3 = arith.cmpi eq, %2, %1 : vector<64x128xi32>
    %4 = arith.extui %3 : vector<64x128xi1> to vector<64x128xi32>
    %5 = arith.sitofp %4 : vector<64x128xi32> to vector<64x128xf32>
    %c0_1 = arith.constant 0 : index
    %c0_2 = arith.constant 0 : index
    %6 = vector.load %arg1[%c0_1, %c0_2] : memref<128x16xf32, #tpu.memory_space<vmem>>, vector<128x16xf32>
    %cst = arith.constant dense<0.000000e+00> : vector<64x16xf32>
    %7 = tpu.matmul %5, %6, %cst {dimension_numbers = #tpu.dot_dimension_numbers<[1], [0], [0], [1], [0, 0, 1, 1], [], []>} : vector<64x128xf32>, vector<128x16xf32>, vector<64x16xf32> -> vector<64x16xf32>
    %c0_3 = arith.constant 0 : index
    %c0_4 = arith.constant 0 : index
    %8 = vector.load %arg2[%c0_3, %c0_4] : memref<16x384xf32, #tpu.memory_space<vmem>>, vector<16x384xf32>
    %cst_5 = arith.constant dense<0.000000e+00> : vector<64x384xf32>
    %9 = tpu.matmul %7, %8, %cst_5 {dimension_numbers = #tpu.dot_dimension_numbers<[1], [0], [0], [1], [0, 0, 1, 1], [], []>} : vector<64x16xf32>, vector<16x384xf32>, vector<64x384xf32> -> vector<64x384xf32>
    %c0_6 = arith.constant 0 : index
    %c0_7 = arith.constant 0 : index
    %10 = vector.load %arg4[%c0_6, %c0_7] : memref<1x384xf32, #tpu.memory_space<vmem>>, vector<1x384xf32>
    %11 = vector.broadcast %10 : vector<1x384xf32> to vector<64x384xf32>
    %12 = arith.addf %9, %11 : vector<64x384xf32>
    %c0_8 = arith.constant 0 : index
    %c0_9 = arith.constant 0 : index
    %13 = vector.load %arg9[%c0_8, %c0_9] : memref<64x384xf32, #tpu.memory_space<vmem>>, vector<64x384xf32>
    tpu.vector_store %arg9[%c0_8, %c0_9], %12 {strides = array<i32>} : memref<64x384xf32, #tpu.memory_space<vmem>>, vector<64x384xf32>,
    %c0_10 = arith.constant 0 : index
    %c0_11 = arith.constant 0 : index
    %14 = vector.load %arg3[%c0_10, %c0_11] : memref<128x384xf32, #tpu.memory_space<vmem>>, vector<128x384xf32>
    %c0_12 = arith.constant 0 : index
    %c0_13 = arith.constant 0 : index
    %15 = vector.load %arg5[%c0_12, %c0_13] : memref<1x128xf32, #tpu.memory_space<vmem>>, vector<1x128xf32>
    %16 = vector.shape_cast %15 : vector<1x128xf32> to vector<1x128xf32>
    %17 = vector.broadcast %16 : vector<1x128xf32> to vector<8x128xf32>
    %cst_14 = arith.constant 0.000000e+00 : f32
    %18 = vector.broadcast %cst_14 : f32 to vector<8x128xf32>
    %c0_i32 = arith.constant 0 : i32
    %c8_i32 = arith.constant 8 : i32
    %19 = arith.muli %c0_i32, %c8_i32 : i32
    %20 = tpu.assume_multiple %19, 8 : i32
    %21 = arith.index_cast %20 : i32 to index
    %c0_15 = arith.constant 0 : index
    %22 = vector.load %arg9[%21, %c0_15] : memref<64x384xf32, #tpu.memory_space<vmem>>, vector<8x384xf32>
    %cst_16 = arith.constant dense<0.000000e+00> : vector<8x384xf32>
    %23 = tpu.matmul %18, %14, %cst_16 {dimension_numbers = #tpu.dot_dimension_numbers<[1], [0], [0], [1], [0, 0, 1, 1], [], []>} : vector<8x128xf32>, vector<128x384xf32>, vector<8x384xf32> -> vector<8x384xf32>
    %24 = vector.extract_strided_slice %22 {offsets = [0, 0], sizes = [8, 128], strides = [1, 1]} : vector<8x384xf32> to vector<8x128xf32>
    %25 = vector.extract_strided_slice %22 {offsets = [0, 128], sizes = [8, 128], strides = [1, 1]} : vector<8x384xf32> to vector<8x128xf32>
    %26 = vector.extract_strided_slice %22 {offsets = [0, 256], sizes = [8, 128], strides = [1, 1]} : vector<8x384xf32> to vector<8x128xf32>
    %27 = vector.extract_strided_slice %23 {offsets = [0, 0], sizes = [8, 128], strides = [1, 1]} : vector<8x384xf32> to vector<8x128xf32>
    %28 = vector.extract_strided_slice %23 {offsets = [0, 128], sizes = [8, 128], strides = [1, 1]} : vector<8x384xf32> to vector<8x128xf32>
    %29 = vector.extract_strided_slice %23 {offsets = [0, 256], sizes = [8, 128], strides = [1, 1]} : vector<8x384xf32> to vector<8x128xf32>
    %30 = arith.addf %24, %27 : vector<8x128xf32>
    %31 = arith.negf %30 : vector<8x128xf32>
    %32 = math.exp %31 : vector<8x128xf32>
    %cst_17 = arith.constant 1.000000e+00 : f32
    %33 = vector.broadcast %cst_17 : f32 to vector<8x128xf32>
    %34 = arith.addf %33, %32 : vector<8x128xf32>
    %35 = arith.divf %33, %34 : vector<8x128xf32>
    %36 = arith.addf %25, %28 : vector<8x128xf32>
    %37 = arith.negf %36 : vector<8x128xf32>
    %38 = math.exp %37 : vector<8x128xf32>
    %cst_18 = arith.constant 1.000000e+00 : f32
    %39 = vector.broadcast %cst_18 : f32 to vector<8x128xf32>
    %40 = arith.addf %39, %38 : vector<8x128xf32>
    %41 = arith.divf %39, %40 : vector<8x128xf32>
    %42 = arith.addf %29, %17 : vector<8x128xf32>
    %43 = arith.mulf %35, %42 : vector<8x128xf32>
    %44 = arith.addf %26, %43 : vector<8x128xf32>
    %45 = math.tanh %44 : vector<8x128xf32>
    %46 = arith.subf %18, %45 : vector<8x128xf32>
    %47 = arith.mulf %41, %46 : vector<8x128xf32>
    %48 = arith.addf %45, %47 : vector<8x128xf32>
    %c1_i32 = arith.constant 1 : i32
    %c8_i32_19 = arith.constant 8 : i32
    %49 = arith.muli %c1_i32, %c8_i32_19 : i32
    %50 = tpu.assume_multiple %49, 8 : i32
    %51 = arith.index_cast %50 : i32 to index
    %c0_20 = arith.constant 0 : index
    %52 = vector.load %arg9[%51, %c0_20] : memref<64x384xf32, #tpu.memory_space<vmem>>, vector<8x384xf32>
    %cst_21 = arith.constant dense<0.000000e+00> : vector<8x384xf32>
    %53 = tpu.matmul %48, %14, %cst_21 {dimension_numbers = #tpu.dot_dimension_numbers<[1], [0], [0], [1], [0, 0, 1, 1], [], []>} : vector<8x128xf32>, vector<128x384xf32>, vector<8x384xf32> -> vector<8x384xf32>
    %54 = vector.extract_strided_slice %52 {offsets = [0, 0], sizes = [8, 128], strides = [1, 1]} : vector<8x384xf32> to vector<8x128xf32>
    %55 = vector.extract_strided_slice %52 {offsets = [0, 128], sizes = [8, 128], strides = [1, 1]} : vector<8x384xf32> to vector<8x128xf32>
    %56 = vector.extract_strided_slice %52 {offsets = [0, 256], sizes = [8, 128], strides = [1, 1]} : vector<8x384xf32> to vector<8x128xf32>
    %57 = vector.extract_strided_slice %53 {offsets = [0, 0], sizes = [8, 128], strides = [1, 1]} : vector<8x384xf32> to vector<8x128xf32>
    %58 = vector.extract_strided_slice %53 {offsets = [0, 128], sizes = [8, 128], strides = [1, 1]} : vector<8x384xf32> to vector<8x128xf32>
    %59 = vector.extract_strided_slice %53 {offsets = [0, 256], sizes = [8, 128], strides = [1, 1]} : vector<8x384xf32> to vector<8x128xf32>
    %60 = arith.addf %54, %57 : vector<8x128xf32>
    %61 = arith.negf %60 : vector<8x128xf32>
    %62 = math.exp %61 : vector<8x128xf32>
    %cst_22 = arith.constant 1.000000e+00 : f32
    %63 = vector.broadcast %cst_22 : f32 to vector<8x128xf32>
    %64 = arith.addf %63, %62 : vector<8x128xf32>
    %65 = arith.divf %63, %64 : vector<8x128xf32>
    %66 = arith.addf %55, %58 : vector<8x128xf32>
    %67 = arith.negf %66 : vector<8x128xf32>
    %68 = math.exp %67 : vector<8x128xf32>
    %cst_23 = arith.constant 1.000000e+00 : f32
    %69 = vector.broadcast %cst_23 : f32 to vector<8x128xf32>
    %70 = arith.addf %69, %68 : vector<8x128xf32>
    %71 = arith.divf %69, %70 : vector<8x128xf32>
    %72 = arith.addf %59, %17 : vector<8x128xf32>
    %73 = arith.mulf %65, %72 : vector<8x128xf32>
    %74 = arith.addf %56, %73 : vector<8x128xf32>
    %75 = math.tanh %74 : vector<8x128xf32>
    %76 = arith.subf %48, %75 : vector<8x128xf32>
    %77 = arith.mulf %71, %76 : vector<8x128xf32>
    %78 = arith.addf %75, %77 : vector<8x128xf32>
    %c2_i32 = arith.constant 2 : i32
    %c8_i32_24 = arith.constant 8 : i32
    %79 = arith.muli %c2_i32, %c8_i32_24 : i32
    %80 = tpu.assume_multiple %79, 8 : i32
    %81 = arith.index_cast %80 : i32 to index
    %c0_25 = arith.constant 0 : index
    %82 = vector.load %arg9[%81, %c0_25] : memref<64x384xf32, #tpu.memory_space<vmem>>, vector<8x384xf32>
    %cst_26 = arith.constant dense<0.000000e+00> : vector<8x384xf32>
    %83 = tpu.matmul %78, %14, %cst_26 {dimension_numbers = #tpu.dot_dimension_numbers<[1], [0], [0], [1], [0, 0, 1, 1], [], []>} : vector<8x128xf32>, vector<128x384xf32>, vector<8x384xf32> -> vector<8x384xf32>
    %84 = vector.extract_strided_slice %82 {offsets = [0, 0], sizes = [8, 128], strides = [1, 1]} : vector<8x384xf32> to vector<8x128xf32>
    %85 = vector.extract_strided_slice %82 {offsets = [0, 128], sizes = [8, 128], strides = [1, 1]} : vector<8x384xf32> to vector<8x128xf32>
    %86 = vector.extract_strided_slice %82 {offsets = [0, 256], sizes = [8, 128], strides = [1, 1]} : vector<8x384xf32> to vector<8x128xf32>
    %87 = vector.extract_strided_slice %83 {offsets = [0, 0], sizes = [8, 128], strides = [1, 1]} : vector<8x384xf32> to vector<8x128xf32>
    %88 = vector.extract_strided_slice %83 {offsets = [0, 128], sizes = [8, 128], strides = [1, 1]} : vector<8x384xf32> to vector<8x128xf32>
    %89 = vector.extract_strided_slice %83 {offsets = [0, 256], sizes = [8, 128], strides = [1, 1]} : vector<8x384xf32> to vector<8x128xf32>
    %90 = arith.addf %84, %87 : vector<8x128xf32>
    %91 = arith.negf %90 : vector<8x128xf32>
    %92 = math.exp %91 : vector<8x128xf32>
    %cst_27 = arith.constant 1.000000e+00 : f32
    %93 = vector.broadcast %cst_27 : f32 to vector<8x128xf32>
    %94 = arith.addf %93, %92 : vector<8x128xf32>
    %95 = arith.divf %93, %94 : vector<8x128xf32>
    %96 = arith.addf %85, %88 : vector<8x128xf32>
    %97 = arith.negf %96 : vector<8x128xf32>
    %98 = math.exp %97 : vector<8x128xf32>
    %cst_28 = arith.constant 1.000000e+00 : f32
    %99 = vector.broadcast %cst_28 : f32 to vector<8x128xf32>
    %100 = arith.addf %99, %98 : vector<8x128xf32>
    %101 = arith.divf %99, %100 : vector<8x128xf32>
    %102 = arith.addf %89, %17 : vector<8x128xf32>
    %103 = arith.mulf %95, %102 : vector<8x128xf32>
    %104 = arith.addf %86, %103 : vector<8x128xf32>
    %105 = math.tanh %104 : vector<8x128xf32>
    %106 = arith.subf %78, %105 : vector<8x128xf32>
    %107 = arith.mulf %101, %106 : vector<8x128xf32>
    %108 = arith.addf %105, %107 : vector<8x128xf32>
    %c3_i32 = arith.constant 3 : i32
    %c8_i32_29 = arith.constant 8 : i32
    %109 = arith.muli %c3_i32, %c8_i32_29 : i32
    %110 = tpu.assume_multiple %109, 8 : i32
    %111 = arith.index_cast %110 : i32 to index
    %c0_30 = arith.constant 0 : index
    %112 = vector.load %arg9[%111, %c0_30] : memref<64x384xf32, #tpu.memory_space<vmem>>, vector<8x384xf32>
    %cst_31 = arith.constant dense<0.000000e+00> : vector<8x384xf32>
    %113 = tpu.matmul %108, %14, %cst_31 {dimension_numbers = #tpu.dot_dimension_numbers<[1], [0], [0], [1], [0, 0, 1, 1], [], []>} : vector<8x128xf32>, vector<128x384xf32>, vector<8x384xf32> -> vector<8x384xf32>
    %114 = vector.extract_strided_slice %112 {offsets = [0, 0], sizes = [8, 128], strides = [1, 1]} : vector<8x384xf32> to vector<8x128xf32>
    %115 = vector.extract_strided_slice %112 {offsets = [0, 128], sizes = [8, 128], strides = [1, 1]} : vector<8x384xf32> to vector<8x128xf32>
    %116 = vector.extract_strided_slice %112 {offsets = [0, 256], sizes = [8, 128], strides = [1, 1]} : vector<8x384xf32> to vector<8x128xf32>
    %117 = vector.extract_strided_slice %113 {offsets = [0, 0], sizes = [8, 128], strides = [1, 1]} : vector<8x384xf32> to vector<8x128xf32>
    %118 = vector.extract_strided_slice %113 {offsets = [0, 128], sizes = [8, 128], strides = [1, 1]} : vector<8x384xf32> to vector<8x128xf32>
    %119 = vector.extract_strided_slice %113 {offsets = [0, 256], sizes = [8, 128], strides = [1, 1]} : vector<8x384xf32> to vector<8x128xf32>
    %120 = arith.addf %114, %117 : vector<8x128xf32>
    %121 = arith.negf %120 : vector<8x128xf32>
    %122 = math.exp %121 : vector<8x128xf32>
    %cst_32 = arith.constant 1.000000e+00 : f32
    %123 = vector.broadcast %cst_32 : f32 to vector<8x128xf32>
    %124 = arith.addf %123, %122 : vector<8x128xf32>
    %125 = arith.divf %123, %124 : vector<8x128xf32>
    %126 = arith.addf %115, %118 : vector<8x128xf32>
    %127 = arith.negf %126 : vector<8x128xf32>
    %128 = math.exp %127 : vector<8x128xf32>
    %cst_33 = arith.constant 1.000000e+00 : f32
    %129 = vector.broadcast %cst_33 : f32 to vector<8x128xf32>
    %130 = arith.addf %129, %128 : vector<8x128xf32>
    %131 = arith.divf %129, %130 : vector<8x128xf32>
    %132 = arith.addf %119, %17 : vector<8x128xf32>
    %133 = arith.mulf %125, %132 : vector<8x128xf32>
    %134 = arith.addf %116, %133 : vector<8x128xf32>
    %135 = math.tanh %134 : vector<8x128xf32>
    %136 = arith.subf %108, %135 : vector<8x128xf32>
    %137 = arith.mulf %131, %136 : vector<8x128xf32>
    %138 = arith.addf %135, %137 : vector<8x128xf32>
    %c4_i32 = arith.constant 4 : i32
    %c8_i32_34 = arith.constant 8 : i32
    %139 = arith.muli %c4_i32, %c8_i32_34 : i32
    %140 = tpu.assume_multiple %139, 8 : i32
    %141 = arith.index_cast %140 : i32 to index
    %c0_35 = arith.constant 0 : index
    %142 = vector.load %arg9[%141, %c0_35] : memref<64x384xf32, #tpu.memory_space<vmem>>, vector<8x384xf32>
    %cst_36 = arith.constant dense<0.000000e+00> : vector<8x384xf32>
    %143 = tpu.matmul %138, %14, %cst_36 {dimension_numbers = #tpu.dot_dimension_numbers<[1], [0], [0], [1], [0, 0, 1, 1], [], []>} : vector<8x128xf32>, vector<128x384xf32>, vector<8x384xf32> -> vector<8x384xf32>
    %144 = vector.extract_strided_slice %142 {offsets = [0, 0], sizes = [8, 128], strides = [1, 1]} : vector<8x384xf32> to vector<8x128xf32>
    %145 = vector.extract_strided_slice %142 {offsets = [0, 128], sizes = [8, 128], strides = [1, 1]} : vector<8x384xf32> to vector<8x128xf32>
    %146 = vector.extract_strided_slice %142 {offsets = [0, 256], sizes = [8, 128], strides = [1, 1]} : vector<8x384xf32> to vector<8x128xf32>
    %147 = vector.extract_strided_slice %143 {offsets = [0, 0], sizes = [8, 128], strides = [1, 1]} : vector<8x384xf32> to vector<8x128xf32>
    %148 = vector.extract_strided_slice %143 {offsets = [0, 128], sizes = [8, 128], strides = [1, 1]} : vector<8x384xf32> to vector<8x128xf32>
    %149 = vector.extract_strided_slice %143 {offsets = [0, 256], sizes = [8, 128], strides = [1, 1]} : vector<8x384xf32> to vector<8x128xf32>
    %150 = arith.addf %144, %147 : vector<8x128xf32>
    %151 = arith.negf %150 : vector<8x128xf32>
    %152 = math.exp %151 : vector<8x128xf32>
    %cst_37 = arith.constant 1.000000e+00 : f32
    %153 = vector.broadcast %cst_37 : f32 to vector<8x128xf32>
    %154 = arith.addf %153, %152 : vector<8x128xf32>
    %155 = arith.divf %153, %154 : vector<8x128xf32>
    %156 = arith.addf %145, %148 : vector<8x128xf32>
    %157 = arith.negf %156 : vector<8x128xf32>
    %158 = math.exp %157 : vector<8x128xf32>
    %cst_38 = arith.constant 1.000000e+00 : f32
    %159 = vector.broadcast %cst_38 : f32 to vector<8x128xf32>
    %160 = arith.addf %159, %158 : vector<8x128xf32>
    %161 = arith.divf %159, %160 : vector<8x128xf32>
    %162 = arith.addf %149, %17 : vector<8x128xf32>
    %163 = arith.mulf %155, %162 : vector<8x128xf32>
    %164 = arith.addf %146, %163 : vector<8x128xf32>
    %165 = math.tanh %164 : vector<8x128xf32>
    %166 = arith.subf %138, %165 : vector<8x128xf32>
    %167 = arith.mulf %161, %166 : vector<8x128xf32>
    %168 = arith.addf %165, %167 : vector<8x128xf32>
    %c5_i32 = arith.constant 5 : i32
    %c8_i32_39 = arith.constant 8 : i32
    %169 = arith.muli %c5_i32, %c8_i32_39 : i32
    %170 = tpu.assume_multiple %169, 8 : i32
    %171 = arith.index_cast %170 : i32 to index
    %c0_40 = arith.constant 0 : index
    %172 = vector.load %arg9[%171, %c0_40] : memref<64x384xf32, #tpu.memory_space<vmem>>, vector<8x384xf32>
    %cst_41 = arith.constant dense<0.000000e+00> : vector<8x384xf32>
    %173 = tpu.matmul %168, %14, %cst_41 {dimension_numbers = #tpu.dot_dimension_numbers<[1], [0], [0], [1], [0, 0, 1, 1], [], []>} : vector<8x128xf32>, vector<128x384xf32>, vector<8x384xf32> -> vector<8x384xf32>
    %174 = vector.extract_strided_slice %172 {offsets = [0, 0], sizes = [8, 128], strides = [1, 1]} : vector<8x384xf32> to vector<8x128xf32>
    %175 = vector.extract_strided_slice %172 {offsets = [0, 128], sizes = [8, 128], strides = [1, 1]} : vector<8x384xf32> to vector<8x128xf32>
    %176 = vector.extract_strided_slice %172 {offsets = [0, 256], sizes = [8, 128], strides = [1, 1]} : vector<8x384xf32> to vector<8x128xf32>
    %177 = vector.extract_strided_slice %173 {offsets = [0, 0], sizes = [8, 128], strides = [1, 1]} : vector<8x384xf32> to vector<8x128xf32>
    %178 = vector.extract_strided_slice %173 {offsets = [0, 128], sizes = [8, 128], strides = [1, 1]} : vector<8x384xf32> to vector<8x128xf32>
    %179 = vector.extract_strided_slice %173 {offsets = [0, 256], sizes = [8, 128], strides = [1, 1]} : vector<8x384xf32> to vector<8x128xf32>
    %180 = arith.addf %174, %177 : vector<8x128xf32>
    %181 = arith.negf %180 : vector<8x128xf32>
    %182 = math.exp %181 : vector<8x128xf32>
    %cst_42 = arith.constant 1.000000e+00 : f32
    %183 = vector.broadcast %cst_42 : f32 to vector<8x128xf32>
    %184 = arith.addf %183, %182 : vector<8x128xf32>
    %185 = arith.divf %183, %184 : vector<8x128xf32>
    %186 = arith.addf %175, %178 : vector<8x128xf32>
    %187 = arith.negf %186 : vector<8x128xf32>
    %188 = math.exp %187 : vector<8x128xf32>
    %cst_43 = arith.constant 1.000000e+00 : f32
    %189 = vector.broadcast %cst_43 : f32 to vector<8x128xf32>
    %190 = arith.addf %189, %188 : vector<8x128xf32>
    %191 = arith.divf %189, %190 : vector<8x128xf32>
    %192 = arith.addf %179, %17 : vector<8x128xf32>
    %193 = arith.mulf %185, %192 : vector<8x128xf32>
    %194 = arith.addf %176, %193 : vector<8x128xf32>
    %195 = math.tanh %194 : vector<8x128xf32>
    %196 = arith.subf %168, %195 : vector<8x128xf32>
    %197 = arith.mulf %191, %196 : vector<8x128xf32>
    %198 = arith.addf %195, %197 : vector<8x128xf32>
    %c6_i32 = arith.constant 6 : i32
    %c8_i32_44 = arith.constant 8 : i32
    %199 = arith.muli %c6_i32, %c8_i32_44 : i32
    %200 = tpu.assume_multiple %199, 8 : i32
    %201 = arith.index_cast %200 : i32 to index
    %c0_45 = arith.constant 0 : index
    %202 = vector.load %arg9[%201, %c0_45] : memref<64x384xf32, #tpu.memory_space<vmem>>, vector<8x384xf32>
    %cst_46 = arith.constant dense<0.000000e+00> : vector<8x384xf32>
    %203 = tpu.matmul %198, %14, %cst_46 {dimension_numbers = #tpu.dot_dimension_numbers<[1], [0], [0], [1], [0, 0, 1, 1], [], []>} : vector<8x128xf32>, vector<128x384xf32>, vector<8x384xf32> -> vector<8x384xf32>
    %204 = vector.extract_strided_slice %202 {offsets = [0, 0], sizes = [8, 128], strides = [1, 1]} : vector<8x384xf32> to vector<8x128xf32>
    %205 = vector.extract_strided_slice %202 {offsets = [0, 128], sizes = [8, 128], strides = [1, 1]} : vector<8x384xf32> to vector<8x128xf32>
    %206 = vector.extract_strided_slice %202 {offsets = [0, 256], sizes = [8, 128], strides = [1, 1]} : vector<8x384xf32> to vector<8x128xf32>
    %207 = vector.extract_strided_slice %203 {offsets = [0, 0], sizes = [8, 128], strides = [1, 1]} : vector<8x384xf32> to vector<8x128xf32>
    %208 = vector.extract_strided_slice %203 {offsets = [0, 128], sizes = [8, 128], strides = [1, 1]} : vector<8x384xf32> to vector<8x128xf32>
    %209 = vector.extract_strided_slice %203 {offsets = [0, 256], sizes = [8, 128], strides = [1, 1]} : vector<8x384xf32> to vector<8x128xf32>
    %210 = arith.addf %204, %207 : vector<8x128xf32>
    %211 = arith.negf %210 : vector<8x128xf32>
    %212 = math.exp %211 : vector<8x128xf32>
    %cst_47 = arith.constant 1.000000e+00 : f32
    %213 = vector.broadcast %cst_47 : f32 to vector<8x128xf32>
    %214 = arith.addf %213, %212 : vector<8x128xf32>
    %215 = arith.divf %213, %214 : vector<8x128xf32>
    %216 = arith.addf %205, %208 : vector<8x128xf32>
    %217 = arith.negf %216 : vector<8x128xf32>
    %218 = math.exp %217 : vector<8x128xf32>
    %cst_48 = arith.constant 1.000000e+00 : f32
    %219 = vector.broadcast %cst_48 : f32 to vector<8x128xf32>
    %220 = arith.addf %219, %218 : vector<8x128xf32>
    %221 = arith.divf %219, %220 : vector<8x128xf32>
    %222 = arith.addf %209, %17 : vector<8x128xf32>
    %223 = arith.mulf %215, %222 : vector<8x128xf32>
    %224 = arith.addf %206, %223 : vector<8x128xf32>
    %225 = math.tanh %224 : vector<8x128xf32>
    %226 = arith.subf %198, %225 : vector<8x128xf32>
    %227 = arith.mulf %221, %226 : vector<8x128xf32>
    %228 = arith.addf %225, %227 : vector<8x128xf32>
    %c7_i32 = arith.constant 7 : i32
    %c8_i32_49 = arith.constant 8 : i32
    %229 = arith.muli %c7_i32, %c8_i32_49 : i32
    %230 = tpu.assume_multiple %229, 8 : i32
    %231 = arith.index_cast %230 : i32 to index
    %c0_50 = arith.constant 0 : index
    %232 = vector.load %arg9[%231, %c0_50] : memref<64x384xf32, #tpu.memory_space<vmem>>, vector<8x384xf32>
    %cst_51 = arith.constant dense<0.000000e+00> : vector<8x384xf32>
    %233 = tpu.matmul %228, %14, %cst_51 {dimension_numbers = #tpu.dot_dimension_numbers<[1], [0], [0], [1], [0, 0, 1, 1], [], []>} : vector<8x128xf32>, vector<128x384xf32>, vector<8x384xf32> -> vector<8x384xf32>
    %234 = vector.extract_strided_slice %232 {offsets = [0, 0], sizes = [8, 128], strides = [1, 1]} : vector<8x384xf32> to vector<8x128xf32>
    %235 = vector.extract_strided_slice %232 {offsets = [0, 128], sizes = [8, 128], strides = [1, 1]} : vector<8x384xf32> to vector<8x128xf32>
    %236 = vector.extract_strided_slice %232 {offsets = [0, 256], sizes = [8, 128], strides = [1, 1]} : vector<8x384xf32> to vector<8x128xf32>
    %237 = vector.extract_strided_slice %233 {offsets = [0, 0], sizes = [8, 128], strides = [1, 1]} : vector<8x384xf32> to vector<8x128xf32>
    %238 = vector.extract_strided_slice %233 {offsets = [0, 128], sizes = [8, 128], strides = [1, 1]} : vector<8x384xf32> to vector<8x128xf32>
    %239 = vector.extract_strided_slice %233 {offsets = [0, 256], sizes = [8, 128], strides = [1, 1]} : vector<8x384xf32> to vector<8x128xf32>
    %240 = arith.addf %234, %237 : vector<8x128xf32>
    %241 = arith.negf %240 : vector<8x128xf32>
    %242 = math.exp %241 : vector<8x128xf32>
    %cst_52 = arith.constant 1.000000e+00 : f32
    %243 = vector.broadcast %cst_52 : f32 to vector<8x128xf32>
    %244 = arith.addf %243, %242 : vector<8x128xf32>
    %245 = arith.divf %243, %244 : vector<8x128xf32>
    %246 = arith.addf %235, %238 : vector<8x128xf32>
    %247 = arith.negf %246 : vector<8x128xf32>
    %248 = math.exp %247 : vector<8x128xf32>
    %cst_53 = arith.constant 1.000000e+00 : f32
    %249 = vector.broadcast %cst_53 : f32 to vector<8x128xf32>
    %250 = arith.addf %249, %248 : vector<8x128xf32>
    %251 = arith.divf %249, %250 : vector<8x128xf32>
    %252 = arith.addf %239, %17 : vector<8x128xf32>
    %253 = arith.mulf %245, %252 : vector<8x128xf32>
    %254 = arith.addf %236, %253 : vector<8x128xf32>
    %255 = math.tanh %254 : vector<8x128xf32>
    %256 = arith.subf %228, %255 : vector<8x128xf32>
    %257 = arith.mulf %251, %256 : vector<8x128xf32>
    %258 = arith.addf %255, %257 : vector<8x128xf32>
    %c8_i32_54 = arith.constant 8 : i32
    %c0_55 = arith.constant 0 : index
    %c0_56 = arith.constant 0 : index
    %259 = vector.load %arg6[%c0_55, %c0_56] : memref<128x128xf32, #tpu.memory_space<vmem>>, vector<128x128xf32>
    %cst_57 = arith.constant dense<0.000000e+00> : vector<8x128xf32>
    %260 = tpu.matmul %258, %259, %cst_57 {dimension_numbers = #tpu.dot_dimension_numbers<[1], [0], [0], [1], [0, 0, 1, 1], [], []>} : vector<8x128xf32>, vector<128x128xf32>, vector<8x128xf32> -> vector<8x128xf32>
    %c0_58 = arith.constant 0 : index
    %c0_59 = arith.constant 0 : index
    %261 = vector.load %arg7[%c0_58, %c0_59] : memref<1x128xf32, #tpu.memory_space<vmem>>, vector<1x128xf32>
    %262 = vector.broadcast %261 : vector<1x128xf32> to vector<8x128xf32>
    %263 = arith.addf %260, %262 : vector<8x128xf32>
    %c0_60 = arith.constant 0 : index
    %c0_61 = arith.constant 0 : index
    %264 = vector.load %arg8[%c0_60, %c0_61] : memref<8x128xf32, #tpu.memory_space<vmem>>, vector<8x128xf32>
    tpu.vector_store %arg8[%c0_60, %c0_61], %263 {strides = array<i32>} : memref<8x128xf32, #tpu.memory_space<vmem>>, vector<8x128xf32>,
    return
  }
}

</mosaic_0001>

<llo_original>
// kernel: tpu_custom_call.1
$region0: #{tpu_custom_call.1}
  #allocation0 [shape = 'u32[]', space=smem, size = 0x4, offset = 0x4, fixed_abs, tag = 'smem constant byte address 0x4 - core index']
  #allocation1 [shape = 'u32[144,128]{1,0:T(1,128)}', space=vmem, size = 0x12000, scoped, tag = 'internal scratch']
  #allocation2 [shape = 'f32[64,384]{1,0:T(8,128)}', space=vmem, size = 0x18000, scoped, tag = 'scratch operand']
  %s0 = inlined_call_operand.vmem [shape: s32[64,1], index: 0, kind: input, shape index: {}]
  %s1 = inlined_call_operand.vmem [shape: f32[128,16], index: 1, kind: input, shape index: {}]
  %s2 = inlined_call_operand.vmem [shape: f32[16,384], index: 2, kind: input, shape index: {}]
  %s3 = inlined_call_operand.hbm [shape: f32[128,384], index: 3, kind: input, shape index: {}]
  %s4 = inlined_call_operand.vmem [shape: f32[1,384], index: 4, kind: input, shape index: {}]
  %s5 = inlined_call_operand.vmem [shape: f32[1,128], index: 5, kind: input, shape index: {}]
  %s6 = inlined_call_operand.vmem [shape: f32[128,128], index: 6, kind: input, shape index: {}]
  %s7 = inlined_call_operand.vmem [shape: f32[1,128], index: 7, kind: input, shape index: {}]
  %s8 = inlined_call_operand.hbm [shape: f32[8,128], index: 8, kind: output, shape index: {}]
  %s9 = sld [smem:[#allocation0]]
  $region46: #{tpu_custom_call.1} parent=0
    _
  %s11 = ssub.s32 1, %s9
  %s12 = scalar_select 0, %s11, %s9
  $region1: #{tpu_custom_call.1} parent=0
    #allocation3 [shape = 'u8[196608]{0}', space=vmem, size = 0x30000, scoped, tag = 'input window, operand 3, single buffered']
    #allocation4 [shape = 's32[1]{0}', space=sflag, size = 0x4, scoped, tag = 'scoped memory for tpu_custom_call.1']
    #allocation5 [shape = 's32[1]{0}', space=sflag, size = 0x4, scoped, tag = 'scoped memory for tpu_custom_call.1']
    #allocation6 [shape = 'u8[4096]{0}', space=vmem, size = 0x1000, scoped, tag = 'output window, operand 0, single buffered']
    %13 = vsyncpa [#allocation4], 0
    %14 = vsyncpa [#allocation5], 0
    // Predicated region
    $region2: #{tpu_custom_call.1} parent=1 // pred_check
      _
    $region3: #{tpu_custom_call.1} parent=1 // pred_check_branch
      %16 = sbr.rel (0) target = $region5
    $region4: #{tpu_custom_call.1} parent=1 // pred_region
      _
    $region5: #{tpu_custom_call.1} parent=1 // pred_fallthru
      _
    // Predicated region
    $region6: #{tpu_custom_call.1} parent=1 // pred_check
      _
    $region7: #{tpu_custom_call.1} parent=1 // pred_check_branch
      %18 = sbr.rel (0) target = $region9
    $region8: #{tpu_custom_call.1} parent=1 // pred_region
      _
    $region9: #{tpu_custom_call.1} parent=1 // pred_fallthru
      _
    // Predicated region
    $region10: #{tpu_custom_call.1} parent=1 // pred_check
      _
    $region11: #{tpu_custom_call.1} parent=1 // pred_check_branch
      %20 = sbr.rel (0) target = $region13
    $region12: #{tpu_custom_call.1} parent=1 // pred_region
      _
    $region13: #{tpu_custom_call.1} parent=1 // pred_fallthru
      _
    // Predicated region
    $region14: #{tpu_custom_call.1} parent=1 // pred_check
      _
    $region15: #{tpu_custom_call.1} parent=1 // pred_check_branch
      %22 = sbr.rel (0) target = $region17
    $region16: #{tpu_custom_call.1} parent=1 // pred_region
      %s24 = ssub.s32 6144, 6144
      %25 = vsyncadd [#allocation4], %s24
      %s26 = sshll.u32 [#allocation3], 4
      %s27 = int_to_ptr.vmem [resolvable:$true] %s26
      %32 = dma.hbm_to_vmem [thread:$0]  %s3, 6144, %s27, [#allocation4], 384, 384, 24
    $region17: #{tpu_custom_call.1} parent=1 // pred_fallthru
      _
    // Predicated region
    $region18: #{tpu_custom_call.1} parent=1 // pred_check
      _
    $region19: #{tpu_custom_call.1} parent=1 // pred_check_branch
      %34 = sbr.rel (0) target = $region21
    $region20: #{tpu_custom_call.1} parent=1 // pred_region
      _
    $region21: #{tpu_custom_call.1} parent=1 // pred_fallthru
      _
    // Predicated region
    $region22: #{tpu_custom_call.1} parent=1 // pred_check
      _
    $region23: #{tpu_custom_call.1} parent=1 // pred_check_branch
      %36 = sbr.rel (0) target = $region25
    $region24: #{tpu_custom_call.1} parent=1 // pred_region
      _
    $region25: #{tpu_custom_call.1} parent=1 // pred_fallthru
      _
    // Predicated region
    $region26: #{tpu_custom_call.1} parent=1 // pred_check
      _
    $region27: #{tpu_custom_call.1} parent=1 // pred_check_branch
      %38 = sbr.rel (0) target = $region29
    $region28: #{tpu_custom_call.1} parent=1 // pred_region
      _
    $region29: #{tpu_custom_call.1} parent=1 // pred_fallthru
      _
    // Predicated region
    $region30: #{tpu_custom_call.1} parent=1 // pred_check
      _
    $region31: #{tpu_custom_call.1} parent=1 // pred_check_branch
      %40 = sbr.rel (0) target = $region33
    $region32: #{tpu_custom_call.1} parent=1 // pred_region
      _
    $region33: #{tpu_custom_call.1} parent=1 // pred_fallthru
      _
    // Predicated region
    $region34: #{tpu_custom_call.1} parent=1 // pred_check
      _
    $region35: #{tpu_custom_call.1} parent=1 // pred_check_branch
      %42 = sbr.rel (0) target = $region37
    $region36: #{tpu_custom_call.1} parent=1 // pred_region
      %43 = dma.done [#allocation4], 6144
    $region37: #{tpu_custom_call.1} parent=1 // pred_fallthru
      _
    %v44 = vld [vmem:[%s0] sm:$0xff]
    %v45 = vld [vmem:[%s0 + $0x8] sm:$0xff]
    %v46 = vld [vmem:[%s0 + $0x10] sm:$0xff]
    %v47 = vld [vmem:[%s0 + $0x18] sm:$0xff]
    %v48 = vld [vmem:[%s0 + $0x20] sm:$0xff]
    %v49 = vld [vmem:[%s0 + $0x28] sm:$0xff]
    %v50 = vld [vmem:[%s0 + $0x30] sm:$0xff]
    %v51 = vld [vmem:[%s0 + $0x38] sm:$0xff]
    %v52 = vlaneseq
    %v53 = vand.u32 %v52, 127
    %54 = vset.pattern.permute.xlu0 0
    %55 = vperm.xlu0 %54, %v44
    %v56 = vpop.permute.xlu0 %55
    %57 = vset.pattern.permute.xlu0 0
    %58 = vperm.xlu0 %57, %v45
    %v59 = vpop.permute.xlu0 %58
    %60 = vset.pattern.permute.xlu0 0
    %61 = vperm.xlu0 %60, %v46
    %v62 = vpop.permute.xlu0 %61
    %63 = vset.pattern.permute.xlu0 0
    %64 = vperm.xlu0 %63, %v47
    %v65 = vpop.permute.xlu0 %64
    %66 = vset.pattern.permute.xlu0 0
    %67 = vperm.xlu0 %66, %v48
    %v68 = vpop.permute.xlu0 %67
    %69 = vset.pattern.permute.xlu0 0
    %70 = vperm.xlu0 %69, %v49
    %v71 = vpop.permute.xlu0 %70
    %72 = vset.pattern.permute.xlu0 0
    %73 = vperm.xlu0 %72, %v50
    %v74 = vpop.permute.xlu0 %73
    %75 = vset.pattern.permute.xlu0 0
    %76 = vperm.xlu0 %75, %v51
    %v77 = vpop.permute.xlu0 %76
    %vm78 = vcmp.eq.s32.totalorder %v56, %v53
    %vm79 = vcmp.eq.s32.totalorder %v59, %v53
    %vm80 = vcmp.eq.s32.totalorder %v62, %v53
    %vm81 = vcmp.eq.s32.totalorder %v65, %v53
    %vm82 = vcmp.eq.s32.totalorder %v68, %v53
    %vm83 = vcmp.eq.s32.totalorder %v71, %v53
    %vm84 = vcmp.eq.s32.totalorder %v74, %v53
    %vm85 = vcmp.eq.s32.totalorder %v77, %v53
    %v86 = vsel %vm78, 1, 0
    %v87 = vsel %vm79, 1, 0
    %v88 = vsel %vm80, 1, 0
    %v89 = vsel %vm81, 1, 0
    %v90 = vsel %vm82, 1, 0
    %v91 = vsel %vm83, 1, 0
    %v92 = vsel %vm84, 1, 0
    %v93 = vsel %vm85, 1, 0
    %v94 = vcvt.s32.f32 %v86
    %v95 = vcvt.s32.f32 %v87
    %v96 = vcvt.s32.f32 %v88
    %v97 = vcvt.s32.f32 %v89
    %v98 = vcvt.s32.f32 %v90
    %v99 = vcvt.s32.f32 %v91
    %v100 = vcvt.s32.f32 %v92
    %v101 = vcvt.s32.f32 %v93
    %v102 = vld [vmem:[%s1] sm:$0xff]
    %v103 = vld [vmem:[%s1 + $0x8] sm:$0xff]
    %v104 = vld [vmem:[%s1 + $0x10] sm:$0xff]
    %v105 = vld [vmem:[%s1 + $0x18] sm:$0xff]
    %v106 = vld [vmem:[%s1 + $0x20] sm:$0xff]
    %v107 = vld [vmem:[%s1 + $0x28] sm:$0xff]
    %v108 = vld [vmem:[%s1 + $0x30] sm:$0xff]
    %v109 = vld [vmem:[%s1 + $0x38] sm:$0xff]
    %v110 = vld [vmem:[%s1 + $0x40] sm:$0xff]
    %v111 = vld [vmem:[%s1 + $0x48] sm:$0xff]
    %v112 = vld [vmem:[%s1 + $0x50] sm:$0xff]
    %v113 = vld [vmem:[%s1 + $0x58] sm:$0xff]
    %v114 = vld [vmem:[%s1 + $0x60] sm:$0xff]
    %v115 = vld [vmem:[%s1 + $0x68] sm:$0xff]
    %v116 = vld [vmem:[%s1 + $0x70] sm:$0xff]
    %v117 = vld [vmem:[%s1 + $0x78] sm:$0xff]
    %118 = vmatprep.subr.mxu0 0.0
    %119 = vmatpush1.msra.mxu0 %v102
    %120 = vmatprep.subr.mxu0 0.0
    %121 = vmatpush1.msra.mxu0 %v103
    %122 = vmatprep.subr.mxu0 0.0
    %123 = vmatpush1.msra.mxu0 %v104
    %124 = vmatprep.subr.mxu0 0.0
    %125 = vmatpush1.msra.mxu0 %v105
    %126 = vmatprep.subr.mxu0 0.0
    %127 = vmatpush1.msra.mxu0 %v106
    %128 = vmatprep.subr.mxu0 0.0
    %129 = vmatpush1.msra.mxu0 %v107
    %130 = vmatprep.subr.mxu0 0.0
    %131 = vmatpush1.msra.mxu0 %v108
    %132 = vmatprep.subr.mxu0 0.0
    %133 = vmatpush1.msra.mxu0 %v109
    %134 = vmatprep.subr.mxu0 0.0
    %135 = vmatpush1.msra.mxu0 %v110
    %136 = vmatprep.subr.mxu0 0.0
    %137 = vmatpush1.msra.mxu0 %v111
    %138 = vmatprep.subr.mxu0 0.0
    %139 = vmatpush1.msra.mxu0 %v112
    %140 = vmatprep.subr.mxu0 0.0
    %141 = vmatpush1.msra.mxu0 %v113
    %142 = vmatprep.subr.mxu0 0.0
    %143 = vmatpush1.msra.mxu0 %v114
    %144 = vmatprep.subr.mxu0 0.0
    %145 = vmatpush1.msra.mxu0 %v115
    %146 = vmatprep.subr.mxu0 0.0
    %147 = vmatpush1.msra.mxu0 %v116
    %148 = vmatprep.subr.mxu0 0.0
    %149 = vmatpush1.msra.mxu0 %v117
    %150 = vmatprep.subr.mxu0 0.0
    %151 = vmatpush1.msra.mxu0 0.0
    %152 = vmatprep.subr.mxu0 0.0
    %153 = vmatpush1.msra.mxu0 0.0
    %154 = vmatprep.subr.mxu0 0.0
    %155 = vmatpush1.msra.mxu0 0.0
    %156 = vmatprep.subr.mxu0 0.0
    %157 = vmatpush1.msra.mxu0 0.0
    %158 = vmatprep.subr.mxu0 0.0
    %159 = vmatpush1.msra.mxu0 0.0
    %160 = vmatprep.subr.mxu0 0.0
    %161 = vmatpush1.msra.mxu0 0.0
    %162 = vmatprep.subr.mxu0 0.0
    %163 = vmatpush1.msra.mxu0 0.0
    %164 = vmatprep.subr.mxu0 0.0
    %165 = vmatpush1.msra.mxu0 0.0
    %166 = vmatprep.subr.mxu0 0.0
    %167 = vmatpush1.msra.mxu0 0.0
    %168 = vmatprep.subr.mxu0 0.0
    %169 = vmatpush1.msra.mxu0 0.0
    %170 = vmatprep.subr.mxu0 0.0
    %171 = vmatpush1.msra.mxu0 0.0
    %172 = vmatprep.subr.mxu0 0.0
    %173 = vmatpush1.msra.mxu0 0.0
    %174 = vmatprep.subr.mxu0 0.0
    %175 = vmatpush1.msra.mxu0 0.0
    %176 = vmatprep.subr.mxu0 0.0
    %177 = vmatpush1.msra.mxu0 0.0
    %178 = vmatprep.subr.mxu0 0.0
    %179 = vmatpush1.msra.mxu0 0.0
    %180 = vmatprep.subr.mxu0 0.0
    %181 = vmatpush1.msra.mxu0 0.0
    %182 = vmatprep.mubr.f32.mxu0 0.0
    %183 = vmatmul.mubr.f32.gmra.mrb[0].mxu0 %v94
    %v184 = vpop.f32.mrb[0].mxu0
    %v185 = vadd.f32 0.0, %v184
    %v186 = vpop.f32.mrb[0].mxu0
    %187 = vmatprep.mubr.f32.mxu0 0.0
    %188 = vmatmul.mubr.f32.gmra.mrb[0].mxu0 %v95
    %v189 = vpop.f32.mrb[0].mxu0
    %v190 = vadd.f32 0.0, %v189
    %v191 = vpop.f32.mrb[0].mxu0
    %192 = vmatprep.mubr.f32.mxu0 0.0
    %193 = vmatmul.mubr.f32.gmra.mrb[0].mxu0 %v96
    %v194 = vpop.f32.mrb[0].mxu0
    %v195 = vadd.f32 0.0, %v194
    %v196 = vpop.f32.mrb[0].mxu0
    %197 = vmatprep.mubr.f32.mxu0 0.0
    %198 = vmatmul.mubr.f32.gmra.mrb[0].mxu0 %v97
    %v199 = vpop.f32.mrb[0].mxu0
    %v200 = vadd.f32 0.0, %v199
    %v201 = vpop.f32.mrb[0].mxu0
    %202 = vmatprep.mubr.f32.mxu0 0.0
    %203 = vmatmul.mubr.f32.gmra.mrb[0].mxu0 %v98
    %v204 = vpop.f32.mrb[0].mxu0
    %v205 = vadd.f32 0.0, %v204
    %v206 = vpop.f32.mrb[0].mxu0
    %207 = vmatprep.mubr.f32.mxu0 0.0
    %208 = vmatmul.mubr.f32.gmra.mrb[0].mxu0 %v99
    %v209 = vpop.f32.mrb[0].mxu0
    %v210 = vadd.f32 0.0, %v209
    %v211 = vpop.f32.mrb[0].mxu0
    %212 = vmatprep.mubr.f32.mxu0 0.0
    %213 = vmatmul.mubr.f32.gmra.mrb[0].mxu0 %v100
    %v214 = vpop.f32.mrb[0].mxu0
    %v215 = vadd.f32 0.0, %v214
    %v216 = vpop.f32.mrb[0].mxu0
    %217 = vmatprep.mubr.f32.mxu0 0.0
    %218 = vmatmul.mubr.f32.gmra.mrb[0].mxu0 %v101
    %v219 = vpop.f32.mrb[0].mxu0
    %v220 = vadd.f32 0.0, %v219
    %v221 = vpop.f32.mrb[0].mxu0
    %222 = vdwg.mxu0
    %v223 = vld [vmem:[%s2] sm:$0xff]
    %v224 = vld [vmem:[%s2 + $0x8] sm:$0xff]
    %v225 = vld [vmem:[%s2 + $0x10] sm:$0xff]
    %v226 = vld [vmem:[%s2 + $0x18] sm:$0xff]
    %v227 = vld [vmem:[%s2 + $0x20] sm:$0xff]
    %v228 = vld [vmem:[%s2 + $0x28] sm:$0xff]
    %v229 = vld [vmem:[%s4] sm:$0x7]
    %v231 = vlaneseq
    %v232 = vshrl.u32 %v231, 7
    %v233 = vsub.s32 0, %v232
    %v234 = vrot.slane %v229, %v233
    %v235 = vlaneseq
    %v236 = vshrl.u32 %v235, 7
    %v237 = vsub.s32 1, %v236
    %v238 = vrot.slane %v229, %v237
    %v239 = vlaneseq
    %v240 = vshrl.u32 %v239, 7
    %v241 = vsub.s32 2, %v240
    %v242 = vrot.slane %v229, %v241
    %vm246 = vcmask 130048
    %v248 = vsel %vm246, %v185, 0
    %v251 = vsel %vm246, %v190, 0
    %v254 = vsel %vm246, %v195, 0
    %v257 = vsel %vm246, %v200, 0
    %v260 = vsel %vm246, %v205, 0
    %v263 = vsel %vm246, %v210, 0
    %v266 = vsel %vm246, %v215, 0
    %v269 = vsel %vm246, %v220, 0
    %271 = vmatprep.subr.mxu0 %v224
    %272 = vmatpush1.msra.mxu0 %v223
    %273 = vmatprep.subr.mxu0 %v227
    %274 = vmatpush1.msra.mxu0 %v226
    %275 = vmatprep.subr.mxu0 0.0
    %276 = vmatpush1.msra.mxu0 0.0
    %277 = vmatprep.subr.mxu0 0.0
    %278 = vmatpush1.msra.mxu0 0.0
    %279 = vmatprep.subr.mxu0 0.0
    %280 = vmatpush1.msra.mxu0 0.0
    %281 = vmatprep.subr.mxu0 0.0
    %282 = vmatpush1.msra.mxu0 0.0
    %283 = vmatprep.subr.mxu0 0.0
    %284 = vmatpush1.msra.mxu0 0.0
    %285 = vmatprep.subr.mxu0 0.0
    %286 = vmatpush1.msra.mxu0 0.0
    %287 = vmatprep.subr.mxu0 0.0
    %288 = vmatpush1.msra.mxu0 0.0
    %289 = vmatprep.subr.mxu0 0.0
    %290 = vmatpush1.msra.mxu0 0.0
    %291 = vmatprep.subr.mxu0 0.0
    %292 = vmatpush1.msra.mxu0 0.0
    %293 = vmatprep.subr.mxu0 0.0
    %294 = vmatpush1.msra.mxu0 0.0
    %295 = vmatprep.subr.mxu0 0.0
    %296 = vmatpush1.msra.mxu0 0.0
    %297 = vmatprep.subr.mxu0 0.0
    %298 = vmatpush1.msra.mxu0 0.0
    %299 = vmatprep.subr.mxu0 0.0
    %300 = vmatpush1.msra.mxu0 0.0
    %301 = vmatprep.subr.mxu0 0.0
    %302 = vmatpush1.msra.mxu0 0.0
    %303 = vmatprep.subr.mxu0 0.0
    %304 = vmatpush1.msra.mxu0 0.0
    %305 = vmatprep.subr.mxu0 0.0
    %306 = vmatpush1.msra.mxu0 0.0
    %307 = vmatprep.subr.mxu0 0.0
    %308 = vmatpush1.msra.mxu0 0.0
    %309 = vmatprep.subr.mxu0 0.0
    %310 = vmatpush1.msra.mxu0 0.0
    %311 = vmatprep.subr.mxu0 0.0
    %312 = vmatpush1.msra.mxu0 0.0
    %313 = vmatprep.subr.mxu0 0.0
    %314 = vmatpush1.msra.mxu0 0.0
    %315 = vmatprep.subr.mxu0 0.0
    %316 = vmatpush1.msra.mxu0 0.0
    %317 = vmatprep.subr.mxu0 0.0
    %318 = vmatpush1.msra.mxu0 0.0
    %319 = vmatprep.subr.mxu0 0.0
    %320 = vmatpush1.msra.mxu0 0.0
    %321 = vmatprep.subr.mxu0 0.0
    %322 = vmatpush1.msra.mxu0 0.0
    %323 = vmatprep.subr.mxu0 0.0
    %324 = vmatpush1.msra.mxu0 0.0
    %325 = vmatprep.subr.mxu0 0.0
    %326 = vmatpush1.msra.mxu0 0.0
    %327 = vmatprep.subr.mxu0 0.0
    %328 = vmatpush1.msra.mxu0 0.0
    %329 = vmatprep.subr.mxu0 0.0
    %330 = vmatpush1.msra.mxu0 0.0
    %331 = vmatprep.subr.mxu0 0.0
    %332 = vmatpush1.msra.mxu0 0.0
    %333 = vmatprep.subr.mxu0 0.0
    %334 = vmatpush1.msra.mxu0 0.0
    %335 = vmatprep.mubr.f32.mxu0 0.0
    %336 = vmatmul.mubr.f32.gmra.mrb[0].mxu0 %v248
    %v337 = vpop.f32.mrb[0].mxu0
    %v338 = vadd.f32 %v234, %v337
    %v339 = vpop.f32.mrb[0].mxu0
    %v340 = vadd.f32 %v238, %v339
    %341 = vmatprep.mubr.f32.mxu0 0.0
    %342 = vmatmul.mubr.f32.gmra.mrb[0].mxu0 %v251
    %v343 = vpop.f32.mrb[0].mxu0
    %v344 = vadd.f32 %v234, %v343
    %v345 = vpop.f32.mrb[0].mxu0
    %v346 = vadd.f32 %v238, %v345
    %347 = vmatprep.mubr.f32.mxu0 0.0
    %348 = vmatmul.mubr.f32.gmra.mrb[0].mxu0 %v254
    %v349 = vpop.f32.mrb[0].mxu0
    %v350 = vadd.f32 %v234, %v349
    %v351 = vpop.f32.mrb[0].mxu0
    %v352 = vadd.f32 %v238, %v351
    %353 = vmatprep.mubr.f32.mxu0 0.0
    %354 = vmatmul.mubr.f32.gmra.mrb[0].mxu0 %v257
    %v355 = vpop.f32.mrb[0].mxu0
    %v356 = vadd.f32 %v234, %v355
    %v357 = vpop.f32.mrb[0].mxu0
    %v358 = vadd.f32 %v238, %v357
    %359 = vmatprep.mubr.f32.mxu0 0.0
    %360 = vmatmul.mubr.f32.gmra.mrb[0].mxu0 %v260
    %v361 = vpop.f32.mrb[0].mxu0
    %v362 = vadd.f32 %v234, %v361
    %v363 = vpop.f32.mrb[0].mxu0
    %v364 = vadd.f32 %v238, %v363
    %365 = vmatprep.mubr.f32.mxu0 0.0
    %366 = vmatmul.mubr.f32.gmra.mrb[0].mxu0 %v263
    %v367 = vpop.f32.mrb[0].mxu0
    %v368 = vadd.f32 %v234, %v367
    %v369 = vpop.f32.mrb[0].mxu0
    %v370 = vadd.f32 %v238, %v369
    %371 = vmatprep.mubr.f32.mxu0 0.0
    %372 = vmatmul.mubr.f32.gmra.mrb[0].mxu0 %v266
    %v373 = vpop.f32.mrb[0].mxu0
    %v374 = vadd.f32 %v234, %v373
    %v375 = vpop.f32.mrb[0].mxu0
    %v376 = vadd.f32 %v238, %v375
    %377 = vmatprep.mubr.f32.mxu0 0.0
    %378 = vmatmul.mubr.f32.gmra.mrb[0].mxu0 %v269
    %v379 = vpop.f32.mrb[0].mxu0
    %v380 = vadd.f32 %v234, %v379
    %v381 = vpop.f32.mrb[0].mxu0
    %v382 = vadd.f32 %v238, %v381
    %383 = vdwg.mxu0
    %384 = vmatprep.subr.mxu0 0.0
    %385 = vmatpush1.msra.mxu0 %v225
    %386 = vmatprep.subr.mxu0 0.0
    %387 = vmatpush1.msra.mxu0 %v228
    %388 = vmatprep.subr.mxu0 0.0
    %389 = vmatpush1.msra.mxu0 0.0
    %390 = vmatprep.subr.mxu0 0.0
    %391 = vmatpush1.msra.mxu0 0.0
    %392 = vmatprep.subr.mxu0 0.0
    %393 = vmatpush1.msra.mxu0 0.0
    %394 = vmatprep.subr.mxu0 0.0
    %395 = vmatpush1.msra.mxu0 0.0
    %396 = vmatprep.subr.mxu0 0.0
    %397 = vmatpush1.msra.mxu0 0.0
    %398 = vmatprep.subr.mxu0 0.0
    %399 = vmatpush1.msra.mxu0 0.0
    %400 = vmatprep.subr.mxu0 0.0
    %401 = vmatpush1.msra.mxu0 0.0
    %402 = vmatprep.subr.mxu0 0.0
    %403 = vmatpush1.msra.mxu0 0.0
    %404 = vmatprep.subr.mxu0 0.0
    %405 = vmatpush1.msra.mxu0 0.0
    %406 = vmatprep.subr.mxu0 0.0
    %407 = vmatpush1.msra.mxu0 0.0
    %408 = vmatprep.subr.mxu0 0.0
    %409 = vmatpush1.msra.mxu0 0.0
    %410 = vmatprep.subr.mxu0 0.0
    %411 = vmatpush1.msra.mxu0 0.0
    %412 = vmatprep.subr.mxu0 0.0
    %413 = vmatpush1.msra.mxu0 0.0
    %414 = vmatprep.subr.mxu0 0.0
    %415 = vmatpush1.msra.mxu0 0.0
    %416 = vmatprep.subr.mxu0 0.0
    %417 = vmatpush1.msra.mxu0 0.0
    %418 = vmatprep.subr.mxu0 0.0
    %419 = vmatpush1.msra.mxu0 0.0
    %420 = vmatprep.subr.mxu0 0.0
    %421 = vmatpush1.msra.mxu0 0.0
    %422 = vmatprep.subr.mxu0 0.0
    %423 = vmatpush1.msra.mxu0 0.0
    %424 = vmatprep.subr.mxu0 0.0
    %425 = vmatpush1.msra.mxu0 0.0
    %426 = vmatprep.subr.mxu0 0.0
    %427 = vmatpush1.msra.mxu0 0.0
    %428 = vmatprep.subr.mxu0 0.0
    %429 = vmatpush1.msra.mxu0 0.0
    %430 = vmatprep.subr.mxu0 0.0
    %431 = vmatpush1.msra.mxu0 0.0
    %432 = vmatprep.subr.mxu0 0.0
    %433 = vmatpush1.msra.mxu0 0.0
    %434 = vmatprep.subr.mxu0 0.0
    %435 = vmatpush1.msra.mxu0 0.0
    %436 = vmatprep.subr.mxu0 0.0
    %437 = vmatpush1.msra.mxu0 0.0
    %438 = vmatprep.subr.mxu0 0.0
    %439 = vmatpush1.msra.mxu0 0.0
    %440 = vmatprep.subr.mxu0 0.0
    %441 = vmatpush1.msra.mxu0 0.0
    %442 = vmatprep.subr.mxu0 0.0
    %443 = vmatpush1.msra.mxu0 0.0
    %444 = vmatprep.subr.mxu0 0.0
    %445 = vmatpush1.msra.mxu0 0.0
    %446 = vmatprep.subr.mxu0 0.0
    %447 = vmatpush1.msra.mxu0 0.0
    %448 = vmatprep.mubr.f32.mxu0 0.0
    %449 = vmatmul.mubr.f32.gmra.mrb[0].mxu0 %v248
    %v450 = vpop.f32.mrb[0].mxu0
    %v451 = vadd.f32 %v242, %v450
    %v452 = vpop.f32.mrb[0].mxu0
    %453 = vmatprep.mubr.f32.mxu0 0.0
    %454 = vmatmul.mubr.f32.gmra.mrb[0].mxu0 %v251
    %v455 = vpop.f32.mrb[0].mxu0
    %v456 = vadd.f32 %v242, %v455
    %v457 = vpop.f32.mrb[0].mxu0
    %458 = vmatprep.mubr.f32.mxu0 0.0
    %459 = vmatmul.mubr.f32.gmra.mrb[0].mxu0 %v254
    %v460 = vpop.f32.mrb[0].mxu0
    %v461 = vadd.f32 %v242, %v460
    %v462 = vpop.f32.mrb[0].mxu0
    %463 = vmatprep.mubr.f32.mxu0 0.0
    %464 = vmatmul.mubr.f32.gmra.mrb[0].mxu0 %v257
    %v465 = vpop.f32.mrb[0].mxu0
    %v466 = vadd.f32 %v242, %v465
    %v467 = vpop.f32.mrb[0].mxu0
    %468 = vmatprep.mubr.f32.mxu0 0.0
    %469 = vmatmul.mubr.f32.gmra.mrb[0].mxu0 %v260
    %v470 = vpop.f32.mrb[0].mxu0
    %v471 = vadd.f32 %v242, %v470
    %v472 = vpop.f32.mrb[0].mxu0
    %473 = vmatprep.mubr.f32.mxu0 0.0
    %474 = vmatmul.mubr.f32.gmra.mrb[0].mxu0 %v263
    %v475 = vpop.f32.mrb[0].mxu0
    %v476 = vadd.f32 %v242, %v475
    %v477 = vpop.f32.mrb[0].mxu0
    %478 = vmatprep.mubr.f32.mxu0 0.0
    %479 = vmatmul.mubr.f32.gmra.mrb[0].mxu0 %v266
    %v480 = vpop.f32.mrb[0].mxu0
    %v481 = vadd.f32 %v242, %v480
    %v482 = vpop.f32.mrb[0].mxu0
    %483 = vmatprep.mubr.f32.mxu0 0.0
    %484 = vmatmul.mubr.f32.gmra.mrb[0].mxu0 %v269
    %v485 = vpop.f32.mrb[0].mxu0
    %v486 = vadd.f32 %v242, %v485
    %v487 = vpop.f32.mrb[0].mxu0
    %488 = vdwg.mxu0
    %489 = vst [vmem:[#allocation2] sm:$0xff] %v338
    %490 = vst [vmem:[#allocation2 + $0x8] sm:$0xff] %v340
    %491 = vst [vmem:[#allocation2 + $0x10] sm:$0xff] %v451
    %492 = vst [vmem:[#allocation2 + $0x18] sm:$0xff] %v344
    %493 = vst [vmem:[#allocation2 + $0x20] sm:$0xff] %v346
    %494 = vst [vmem:[#allocation2 + $0x28] sm:$0xff] %v456
    %495 = vst [vmem:[#allocation2 + $0x30] sm:$0xff] %v350
    %496 = vst [vmem:[#allocation2 + $0x38] sm:$0xff] %v352
    %497 = vst [vmem:[#allocation2 + $0x40] sm:$0xff] %v461
    %498 = vst [vmem:[#allocation2 + $0x48] sm:$0xff] %v356
    %499 = vst [vmem:[#allocation2 + $0x50] sm:$0xff] %v358
    %500 = vst [vmem:[#allocation2 + $0x58] sm:$0xff] %v466
    %501 = vst [vmem:[#allocation2 + $0x60] sm:$0xff] %v362
    %502 = vst [vmem:[#allocation2 + $0x68] sm:$0xff] %v364
    %503 = vst [vmem:[#allocation2 + $0x70] sm:$0xff] %v471
    %504 = vst [vmem:[#allocation2 + $0x78] sm:$0xff] %v368
    %505 = vst [vmem:[#allocation2 + $0x80] sm:$0xff] %v370
    %506 = vst [vmem:[#allocation2 + $0x88] sm:$0xff] %v476
    %507 = vst [vmem:[#allocation2 + $0x90] sm:$0xff] %v374
    %508 = vst [vmem:[#allocation2 + $0x98] sm:$0xff] %v376
    %509 = vst [vmem:[#allocation2 + $0xa0] sm:$0xff] %v481
    %510 = vst [vmem:[#allocation2 + $0xa8] sm:$0xff] %v380
    %511 = vst [vmem:[#allocation2 + $0xb0] sm:$0xff] %v382
    %512 = vst [vmem:[#allocation2 + $0xb8] sm:$0xff] %v486
    %v513 = vld [vmem:[#allocation3] sm:$0xff]
    %v514 = vld [vmem:[#allocation3 + $0x8] sm:$0xff]
    %v515 = vld [vmem:[#allocation3 + $0x10] sm:$0xff]
    %v516 = vld [vmem:[#allocation3 + $0x18] sm:$0xff]
    %v517 = vld [vmem:[#allocation3 + $0x20] sm:$0xff]
    %v518 = vld [vmem:[#allocation3 + $0x28] sm:$0xff]
    %v519 = vld [vmem:[#allocation3 + $0x30] sm:$0xff]
    %v520 = vld [vmem:[#allocation3 + $0x38] sm:$0xff]
    %v521 = vld [vmem:[#allocation3 + $0x40] sm:$0xff]
    %v522 = vld [vmem:[#allocation3 + $0x48] sm:$0xff]
    %v523 = vld [vmem:[#allocation3 + $0x50] sm:$0xff]
    %v524 = vld [vmem:[#allocation3 + $0x58] sm:$0xff]
    %v525 = vld [vmem:[#allocation3 + $0x60] sm:$0xff]
    %v526 = vld [vmem:[#allocation3 + $0x68] sm:$0xff]
    %v527 = vld [vmem:[#allocation3 + $0x70] sm:$0xff]
    %v528 = vld [vmem:[#allocation3 + $0x78] sm:$0xff]
    %v529 = vld [vmem:[#allocation3 + $0x80] sm:$0xff]
    %v530 = vld [vmem:[#allocation3 + $0x88] sm:$0xff]
    %v531 = vld [vmem:[#allocation3 + $0x90] sm:$0xff]
    %v532 = vld [vmem:[#allocation3 + $0x98] sm:$0xff]
    %v533 = vld [vmem:[#allocation3 + $0xa0] sm:$0xff]
    %v534 = vld [vmem:[#allocation3 + $0xa8] sm:$0xff]
    %v535 = vld [vmem:[#allocation3 + $0xb0] sm:$0xff]
    %v536 = vld [vmem:[#allocation3 + $0xb8] sm:$0xff]
    %v537 = vld [vmem:[#allocation3 + $0xc0] sm:$0xff]
    %v538 = vld [vmem:[#allocation3 + $0xc8] sm:$0xff]
    %v539 = vld [vmem:[#allocation3 + $0xd0] sm:$0xff]
    %v540 = vld [vmem:[#allocation3 + $0xd8] sm:$0xff]
    %v541 = vld [vmem:[#allocation3 + $0xe0] sm:$0xff]
    %v542 = vld [vmem:[#allocation3 + $0xe8] sm:$0xff]
    %v543 = vld [vmem:[#allocation3 + $0xf0] sm:$0xff]
    %v544 = vld [vmem:[#allocation3 + $0xf8] sm:$0xff]
    %v545 = vld [vmem:[#allocation3 + $0x100] sm:$0xff]
    %v546 = vld [vmem:[#allocation3 + $0x108] sm:$0xff]
    %v547 = vld [vmem:[#allocation3 + $0x110] sm:$0xff]
    %v548 = vld [vmem:[#allocation3 + $0x118] sm:$0xff]
    %v549 = vld [vmem:[#allocation3 + $0x120] sm:$0xff]
    %v550 = vld [vmem:[#allocation3 + $0x128] sm:$0xff]
    %v551 = vld [vmem:[#allocation3 + $0x130] sm:$0xff]
    %v552 = vld [vmem:[#allocation3 + $0x138] sm:$0xff]
    %v553 = vld [vmem:[#allocation3 + $0x140] sm:$0xff]
    %v554 = vld [vmem:[#allocation3 + $0x148] sm:$0xff]
    %v555 = vld [vmem:[#allocation3 + $0x150] sm:$0xff]
    %v556 = vld [vmem:[#allocation3 + $0x158] sm:$0xff]
    %v557 = vld [vmem:[#allocation3 + $0x160] sm:$0xff]
    %v558 = vld [vmem:[#allocation3 + $0x168] sm:$0xff]
    %v559 = vld [vmem:[#allocation3 + $0x170] sm:$0xff]
    %v560 = vld [vmem:[#allocation3 + $0x178] sm:$0xff]
    %v561 = vld [vmem:[%s5] sm:$0x1]
    %v563 = vlaneseq
    %v564 = vshrl.u32 %v563, 7
    %v565 = vsub.s32 0, %v564
    %v566 = vrot.slane %v561, %v565
    %s568 = smul.u32 0, 3
    %s569 = smul.addr %s568, 8
    %s570 = scalar_lea.vmem [#allocation2], %s569
    %v571 = vld [vmem:[%s570] sm:$0xff]
    %v572 = vld [vmem:[%s570 + $0x8] sm:$0xff]
    %v573 = vld [vmem:[%s570 + $0x10] sm:$0xff]
    %574 = vmatprep.subr.mxu0 %v514
    %575 = vmatpush1.msra.mxu0 %v513
    %576 = vmatprep.subr.mxu0 %v517
    %577 = vmatpush1.msra.mxu0 %v516
    %578 = vmatprep.subr.mxu0 %v520
    %579 = vmatpush1.msra.mxu0 %v519
    %580 = vmatprep.subr.mxu0 %v523
    %581 = vmatpush1.msra.mxu0 %v522
    %582 = vmatprep.subr.mxu0 %v526
    %583 = vmatpush1.msra.mxu0 %v525
    %584 = vmatprep.subr.mxu0 %v529
    %585 = vmatpush1.msra.mxu0 %v528
    %586 = vmatprep.subr.mxu0 %v532
    %587 = vmatpush1.msra.mxu0 %v531
    %588 = vmatprep.subr.mxu0 %v535
    %589 = vmatpush1.msra.mxu0 %v534
    %590 = vmatprep.subr.mxu0 %v538
    %591 = vmatpush1.msra.mxu0 %v537
    %592 = vmatprep.subr.mxu0 %v541
    %593 = vmatpush1.msra.mxu0 %v540
    %594 = vmatprep.subr.mxu0 %v544
    %595 = vmatpush1.msra.mxu0 %v543
    %596 = vmatprep.subr.mxu0 %v547
    %597 = vmatpush1.msra.mxu0 %v546
    %598 = vmatprep.subr.mxu0 %v550
    %599 = vmatpush1.msra.mxu0 %v549
    %600 = vmatprep.subr.mxu0 %v553
    %601 = vmatpush1.msra.mxu0 %v552
    %602 = vmatprep.subr.mxu0 %v556
    %603 = vmatpush1.msra.mxu0 %v555
    %604 = vmatprep.subr.mxu0 %v559
    %605 = vmatpush1.msra.mxu0 %v558
    %606 = vmatprep.subr.mxu0 0.0
    %607 = vmatpush1.msra.mxu0 0.0
    %608 = vmatprep.subr.mxu0 0.0
    %609 = vmatpush1.msra.mxu0 0.0
    %610 = vmatprep.subr.mxu0 0.0
    %611 = vmatpush1.msra.mxu0 0.0
    %612 = vmatprep.subr.mxu0 0.0
    %613 = vmatpush1.msra.mxu0 0.0
    %614 = vmatprep.subr.mxu0 0.0
    %615 = vmatpush1.msra.mxu0 0.0
    %616 = vmatprep.subr.mxu0 0.0
    %617 = vmatpush1.msra.mxu0 0.0
    %618 = vmatprep.subr.mxu0 0.0
    %619 = vmatpush1.msra.mxu0 0.0
    %620 = vmatprep.subr.mxu0 0.0
    %621 = vmatpush1.msra.mxu0 0.0
    %622 = vmatprep.subr.mxu0 0.0
    %623 = vmatpush1.msra.mxu0 0.0
    %624 = vmatprep.subr.mxu0 0.0
    %625 = vmatpush1.msra.mxu0 0.0
    %626 = vmatprep.subr.mxu0 0.0
    %627 = vmatpush1.msra.mxu0 0.0
    %628 = vmatprep.subr.mxu0 0.0
    %629 = vmatpush1.msra.mxu0 0.0
    %630 = vmatprep.subr.mxu0 0.0
    %631 = vmatpush1.msra.mxu0 0.0
    %632 = vmatprep.subr.mxu0 0.0
    %633 = vmatpush1.msra.mxu0 0.0
    %634 = vmatprep.subr.mxu0 0.0
    %635 = vmatpush1.msra.mxu0 0.0
    %636 = vmatprep.subr.mxu0 0.0
    %637 = vmatpush1.msra.mxu0 0.0
    %638 = vmatprep.mubr.f32.mxu0 0.0
    %639 = vmatmul.mubr.f32.gmra.mrb[0].mxu0 0.0
    %v640 = vpop.f32.mrb[0].mxu0
    %v641 = vadd.f32 0.0, %v640
    %v642 = vpop.f32.mrb[0].mxu0
    %v643 = vadd.f32 0.0, %v642
    %644 = vdwg.mxu0
    %645 = vmatprep.subr.mxu0 0.0
    %646 = vmatpush1.msra.mxu0 %v515
    %647 = vmatprep.subr.mxu0 0.0
    %648 = vmatpush1.msra.mxu0 %v518
    %649 = vmatprep.subr.mxu0 0.0
    %650 = vmatpush1.msra.mxu0 %v521
    %651 = vmatprep.subr.mxu0 0.0
    %652 = vmatpush1.msra.mxu0 %v524
    %653 = vmatprep.subr.mxu0 0.0
    %654 = vmatpush1.msra.mxu0 %v527
    %655 = vmatprep.subr.mxu0 0.0
    %656 = vmatpush1.msra.mxu0 %v530
    %657 = vmatprep.subr.mxu0 0.0
    %658 = vmatpush1.msra.mxu0 %v533
    %659 = vmatprep.subr.mxu0 0.0
    %660 = vmatpush1.msra.mxu0 %v536
    %661 = vmatprep.subr.mxu0 0.0
    %662 = vmatpush1.msra.mxu0 %v539
    %663 = vmatprep.subr.mxu0 0.0
    %664 = vmatpush1.msra.mxu0 %v542
    %665 = vmatprep.subr.mxu0 0.0
    %666 = vmatpush1.msra.mxu0 %v545
    %667 = vmatprep.subr.mxu0 0.0
    %668 = vmatpush1.msra.mxu0 %v548
    %669 = vmatprep.subr.mxu0 0.0
    %670 = vmatpush1.msra.mxu0 %v551
    %671 = vmatprep.subr.mxu0 0.0
    %672 = vmatpush1.msra.mxu0 %v554
    %673 = vmatprep.subr.mxu0 0.0
    %674 = vmatpush1.msra.mxu0 %v557
    %675 = vmatprep.subr.mxu0 0.0
    %676 = vmatpush1.msra.mxu0 %v560
    %677 = vmatprep.subr.mxu0 0.0
    %678 = vmatpush1.msra.mxu0 0.0
    %679 = vmatprep.subr.mxu0 0.0
    %680 = vmatpush1.msra.mxu0 0.0
    %681 = vmatprep.subr.mxu0 0.0
    %682 = vmatpush1.msra.mxu0 0.0
    %683 = vmatprep.subr.mxu0 0.0
    %684 = vmatpush1.msra.mxu0 0.0
    %685 = vmatprep.subr.mxu0 0.0
    %686 = vmatpush1.msra.mxu0 0.0
    %687 = vmatprep.subr.mxu0 0.0
    %688 = vmatpush1.msra.mxu0 0.0
    %689 = vmatprep.subr.mxu0 0.0
    %690 = vmatpush1.msra.mxu0 0.0
    %691 = vmatprep.subr.mxu0 0.0
    %692 = vmatpush1.msra.mxu0 0.0
    %693 = vmatprep.subr.mxu0 0.0
    %694 = vmatpush1.msra.mxu0 0.0
    %695 = vmatprep.subr.mxu0 0.0
    %696 = vmatpush1.msra.mxu0 0.0
    %697 = vmatprep.subr.mxu0 0.0
    %698 = vmatpush1.msra.mxu0 0.0
    %699 = vmatprep.subr.mxu0 0.0
    %700 = vmatpush1.msra.mxu0 0.0
    %701 = vmatprep.subr.mxu0 0.0
    %702 = vmatpush1.msra.mxu0 0.0
    %703 = vmatprep.subr.mxu0 0.0
    %704 = vmatpush1.msra.mxu0 0.0
    %705 = vmatprep.subr.mxu0 0.0
    %706 = vmatpush1.msra.mxu0 0.0
    %707 = vmatprep.subr.mxu0 0.0
    %708 = vmatpush1.msra.mxu0 0.0
    %709 = vmatprep.mubr.f32.mxu0 0.0
    %710 = vmatmul.mubr.f32.gmra.mrb[0].mxu0 0.0
    %v711 = vpop.f32.mrb[0].mxu0
    %v712 = vadd.f32 0.0, %v711
    %v713 = vpop.f32.mrb[0].mxu0
    %714 = vdwg.mxu0
    %v715 = vadd.f32 %v571, %v641
    %v716 = vxor.u32 %v715, 2147483648
    %v717 = vmul.f32 %v716, 1.442695
    %v718 = vpow.pop %v717
    %v719 = vadd.f32 %v718, 1.0
    %v720 = vrcp.pop %v719
    %v721 = vmul.f32 1.0, %v720
    %v722 = vadd.f32 %v572, %v643
    %v723 = vxor.u32 %v722, 2147483648
    %v724 = vmul.f32 %v723, 1.442695
    %v725 = vpow.pop %v724
    %v726 = vadd.f32 %v725, 1.0
    %v727 = vrcp.pop %v726
    %v728 = vmul.f32 1.0, %v727
    %v729 = vadd.f32 %v712, %v566
    %v730 = vmul.f32 %v721, %v729
    %v731 = vadd.f32 %v573, %v730
    %v732 = vtanh.pop %v731
    %v733 = vsub.f32 0.0, %v732
    %v734 = vmul.f32 %v728, %v733
    %v735 = vadd.f32 %v732, %v734
    %s736 = smul.u32 1, 3
    %s737 = smul.addr %s736, 8
    %s738 = scalar_lea.vmem [#allocation2], %s737
    %v739 = vld [vmem:[%s738] sm:$0xff]
    %v740 = vld [vmem:[%s738 + $0x8] sm:$0xff]
    %v741 = vld [vmem:[%s738 + $0x10] sm:$0xff]
    %742 = vmatprep.subr.mxu0 %v514
    %743 = vmatpush1.msra.mxu0 %v513
    %744 = vmatprep.subr.mxu0 %v517
    %745 = vmatpush1.msra.mxu0 %v516
    %746 = vmatprep.subr.mxu0 %v520
    %747 = vmatpush1.msra.mxu0 %v519
    %748 = vmatprep.subr.mxu0 %v523
    %749 = vmatpush1.msra.mxu0 %v522
    %750 = vmatprep.subr.mxu0 %v526
    %751 = vmatpush1.msra.mxu0 %v525
    %752 = vmatprep.subr.mxu0 %v529
    %753 = vmatpush1.msra.mxu0 %v528
    %754 = vmatprep.subr.mxu0 %v532
    %755 = vmatpush1.msra.mxu0 %v531
    %756 = vmatprep.subr.mxu0 %v535
    %757 = vmatpush1.msra.mxu0 %v534
    %758 = vmatprep.subr.mxu0 %v538
    %759 = vmatpush1.msra.mxu0 %v537
    %760 = vmatprep.subr.mxu0 %v541
    %761 = vmatpush1.msra.mxu0 %v540
    %762 = vmatprep.subr.mxu0 %v544
    %763 = vmatpush1.msra.mxu0 %v543
    %764 = vmatprep.subr.mxu0 %v547
    %765 = vmatpush1.msra.mxu0 %v546
    %766 = vmatprep.subr.mxu0 %v550
    %767 = vmatpush1.msra.mxu0 %v549
    %768 = vmatprep.subr.mxu0 %v553
    %769 = vmatpush1.msra.mxu0 %v552
    %770 = vmatprep.subr.mxu0 %v556
    %771 = vmatpush1.msra.mxu0 %v555
    %772 = vmatprep.subr.mxu0 %v559
    %773 = vmatpush1.msra.mxu0 %v558
    %774 = vmatprep.subr.mxu0 0.0
    %775 = vmatpush1.msra.mxu0 0.0
    %776 = vmatprep.subr.mxu0 0.0
    %777 = vmatpush1.msra.mxu0 0.0
    %778 = vmatprep.subr.mxu0 0.0
    %779 = vmatpush1.msra.mxu0 0.0
    %780 = vmatprep.subr.mxu0 0.0
    %781 = vmatpush1.msra.mxu0 0.0
    %782 = vmatprep.subr.mxu0 0.0
    %783 = vmatpush1.msra.mxu0 0.0
    %784 = vmatprep.subr.mxu0 0.0
    %785 = vmatpush1.msra.mxu0 0.0
    %786 = vmatprep.subr.mxu0 0.0
    %787 = vmatpush1.msra.mxu0 0.0
    %788 = vmatprep.subr.mxu0 0.0
    %789 = vmatpush1.msra.mxu0 0.0
    %790 = vmatprep.subr.mxu0 0.0
    %791 = vmatpush1.msra.mxu0 0.0
    %792 = vmatprep.subr.mxu0 0.0
    %793 = vmatpush1.msra.mxu0 0.0
    %794 = vmatprep.subr.mxu0 0.0
    %795 = vmatpush1.msra.mxu0 0.0
    %796 = vmatprep.subr.mxu0 0.0
    %797 = vmatpush1.msra.mxu0 0.0
    %798 = vmatprep.subr.mxu0 0.0
    %799 = vmatpush1.msra.mxu0 0.0
    %800 = vmatprep.subr.mxu0 0.0
    %801 = vmatpush1.msra.mxu0 0.0
    %802 = vmatprep.subr.mxu0 0.0
    %803 = vmatpush1.msra.mxu0 0.0
    %804 = vmatprep.subr.mxu0 0.0
    %805 = vmatpush1.msra.mxu0 0.0
    %806 = vmatprep.mubr.f32.mxu0 0.0
    %807 = vmatmul.mubr.f32.gmra.mrb[0].mxu0 %v735
    %v808 = vpop.f32.mrb[0].mxu0
    %v809 = vadd.f32 0.0, %v808
    %v810 = vpop.f32.mrb[0].mxu0
    %v811 = vadd.f32 0.0, %v810
    %812 = vdwg.mxu0
    %813 = vmatprep.subr.mxu0 0.0
    %814 = vmatpush1.msra.mxu0 %v515
    %815 = vmatprep.subr.mxu0 0.0
    %816 = vmatpush1.msra.mxu0 %v518
    %817 = vmatprep.subr.mxu0 0.0
    %818 = vmatpush1.msra.mxu0 %v521
    %819 = vmatprep.subr.mxu0 0.0
    %820 = vmatpush1.msra.mxu0 %v524
    %821 = vmatprep.subr.mxu0 0.0
    %822 = vmatpush1.msra.mxu0 %v527
    %823 = vmatprep.subr.mxu0 0.0
    %824 = vmatpush1.msra.mxu0 %v530
    %825 = vmatprep.subr.mxu0 0.0
    %826 = vmatpush1.msra.mxu0 %v533
    %827 = vmatprep.subr.mxu0 0.0
    %828 = vmatpush1.msra.mxu0 %v536
    %829 = vmatprep.subr.mxu0 0.0
    %830 = vmatpush1.msra.mxu0 %v539
    %831 = vmatprep.subr.mxu0 0.0
    %832 = vmatpush1.msra.mxu0 %v542
    %833 = vmatprep.subr.mxu0 0.0
    %834 = vmatpush1.msra.mxu0 %v545
    %835 = vmatprep.subr.mxu0 0.0
    %836 = vmatpush1.msra.mxu0 %v548
    %837 = vmatprep.subr.mxu0 0.0
    %838 = vmatpush1.msra.mxu0 %v551
    %839 = vmatprep.subr.mxu0 0.0
    %840 = vmatpush1.msra.mxu0 %v554
    %841 = vmatprep.subr.mxu0 0.0
    %842 = vmatpush1.msra.mxu0 %v557
    %843 = vmatprep.subr.mxu0 0.0
    %844 = vmatpush1.msra.mxu0 %v560
    %845 = vmatprep.subr.mxu0 0.0
    %846 = vmatpush1.msra.mxu0 0.0
    %847 = vmatprep.subr.mxu0 0.0
    %848 = vmatpush1.msra.mxu0 0.0
    %849 = vmatprep.subr.mxu0 0.0
    %850 = vmatpush1.msra.mxu0 0.0
    %851 = vmatprep.subr.mxu0 0.0
    %852 = vmatpush1.msra.mxu0 0.0
    %853 = vmatprep.subr.mxu0 0.0
    %854 = vmatpush1.msra.mxu0 0.0
    %855 = vmatprep.subr.mxu0 0.0
    %856 = vmatpush1.msra.mxu0 0.0
    %857 = vmatprep.subr.mxu0 0.0
    %858 = vmatpush1.msra.mxu0 0.0
    %859 = vmatprep.subr.mxu0 0.0
    %860 = vmatpush1.msra.mxu0 0.0
    %861 = vmatprep.subr.mxu0 0.0
    %862 = vmatpush1.msra.mxu0 0.0
    %863 = vmatprep.subr.mxu0 0.0
    %864 = vmatpush1.msra.mxu0 0.0
    %865 = vmatprep.subr.mxu0 0.0
    %866 = vmatpush1.msra.mxu0 0.0
    %867 = vmatprep.subr.mxu0 0.0
    %868 = vmatpush1.msra.mxu0 0.0
    %869 = vmatprep.subr.mxu0 0.0
    %870 = vmatpush1.msra.mxu0 0.0
    %871 = vmatprep.subr.mxu0 0.0
    %872 = vmatpush1.msra.mxu0 0.0
    %873 = vmatprep.subr.mxu0 0.0
    %874 = vmatpush1.msra.mxu0 0.0
    %875 = vmatprep.subr.mxu0 0.0
    %876 = vmatpush1.msra.mxu0 0.0
    %877 = vmatprep.mubr.f32.mxu0 0.0
    %878 = vmatmul.mubr.f32.gmra.mrb[0].mxu0 %v735
    %v879 = vpop.f32.mrb[0].mxu0
    %v880 = vadd.f32 0.0, %v879
    %v881 = vpop.f32.mrb[0].mxu0
    %882 = vdwg.mxu0
    %v883 = vadd.f32 %v739, %v809
    %v884 = vxor.u32 %v883, 2147483648
    %v885 = vmul.f32 %v884, 1.442695
    %v886 = vpow.pop %v885
    %v887 = vadd.f32 %v886, 1.0
    %v888 = vrcp.pop %v887
    %v889 = vmul.f32 1.0, %v888
    %v890 = vadd.f32 %v740, %v811
    %v891 = vxor.u32 %v890, 2147483648
    %v892 = vmul.f32 %v891, 1.442695
    %v893 = vpow.pop %v892
    %v894 = vadd.f32 %v893, 1.0
    %v895 = vrcp.pop %v894
    %v896 = vmul.f32 1.0, %v895
    %v897 = vadd.f32 %v880, %v566
    %v898 = vmul.f32 %v889, %v897
    %v899 = vadd.f32 %v741, %v898
    %v900 = vtanh.pop %v899
    %v901 = vsub.f32 %v735, %v900
    %v902 = vmul.f32 %v896, %v901
    %v903 = vadd.f32 %v900, %v902
    %s904 = smul.u32 2, 3
    %s905 = smul.addr %s904, 8
    %s906 = scalar_lea.vmem [#allocation2], %s905
    %v907 = vld [vmem:[%s906] sm:$0xff]
    %v908 = vld [vmem:[%s906 + $0x8] sm:$0xff]
    %v909 = vld [vmem:[%s906 + $0x10] sm:$0xff]
    %910 = vmatprep.subr.mxu0 %v514
    %911 = vmatpush1.msra.mxu0 %v513
    %912 = vmatprep.subr.mxu0 %v517
    %913 = vmatpush1.msra.mxu0 %v516
    %914 = vmatprep.subr.mxu0 %v520
    %915 = vmatpush1.msra.mxu0 %v519
    %916 = vmatprep.subr.mxu0 %v523
    %917 = vmatpush1.msra.mxu0 %v522
    %918 = vmatprep.subr.mxu0 %v526
    %919 = vmatpush1.msra.mxu0 %v525
    %920 = vmatprep.subr.mxu0 %v529
    %921 = vmatpush1.msra.mxu0 %v528
    %922 = vmatprep.subr.mxu0 %v532
    %923 = vmatpush1.msra.mxu0 %v531
    %924 = vmatprep.subr.mxu0 %v535
    %925 = vmatpush1.msra.mxu0 %v534
    %926 = vmatprep.subr.mxu0 %v538
    %927 = vmatpush1.msra.mxu0 %v537
    %928 = vmatprep.subr.mxu0 %v541
    %929 = vmatpush1.msra.mxu0 %v540
    %930 = vmatprep.subr.mxu0 %v544
    %931 = vmatpush1.msra.mxu0 %v543
    %932 = vmatprep.subr.mxu0 %v547
    %933 = vmatpush1.msra.mxu0 %v546
    %934 = vmatprep.subr.mxu0 %v550
    %935 = vmatpush1.msra.mxu0 %v549
    %936 = vmatprep.subr.mxu0 %v553
    %937 = vmatpush1.msra.mxu0 %v552
    %938 = vmatprep.subr.mxu0 %v556
    %939 = vmatpush1.msra.mxu0 %v555
    %940 = vmatprep.subr.mxu0 %v559
    %941 = vmatpush1.msra.mxu0 %v558
    %942 = vmatprep.subr.mxu0 0.0
    %943 = vmatpush1.msra.mxu0 0.0
    %944 = vmatprep.subr.mxu0 0.0
    %945 = vmatpush1.msra.mxu0 0.0
    %946 = vmatprep.subr.mxu0 0.0
    %947 = vmatpush1.msra.mxu0 0.0
    %948 = vmatprep.subr.mxu0 0.0
    %949 = vmatpush1.msra.mxu0 0.0
    %950 = vmatprep.subr.mxu0 0.0
    %951 = vmatpush1.msra.mxu0 0.0
    %952 = vmatprep.subr.mxu0 0.0
    %953 = vmatpush1.msra.mxu0 0.0
    %954 = vmatprep.subr.mxu0 0.0
    %955 = vmatpush1.msra.mxu0 0.0
    %956 = vmatprep.subr.mxu0 0.0
    %957 = vmatpush1.msra.mxu0 0.0
    %958 = vmatprep.subr.mxu0 0.0
    %959 = vmatpush1.msra.mxu0 0.0
    %960 = vmatprep.subr.mxu0 0.0
    %961 = vmatpush1.msra.mxu0 0.0
    %962 = vmatprep.subr.mxu0 0.0
    %963 = vmatpush1.msra.mxu0 0.0
    %964 = vmatprep.subr.mxu0 0.0
    %965 = vmatpush1.msra.mxu0 0.0
    %966 = vmatprep.subr.mxu0 0.0
    %967 = vmatpush1.msra.mxu0 0.0
    %968 = vmatprep.subr.mxu0 0.0
    %969 = vmatpush1.msra.mxu0 0.0
    %970 = vmatprep.subr.mxu0 0.0
    %971 = vmatpush1.msra.mxu0 0.0
    %972 = vmatprep.subr.mxu0 0.0
    %973 = vmatpush1.msra.mxu0 0.0
    %974 = vmatprep.mubr.f32.mxu0 0.0
    %975 = vmatmul.mubr.f32.gmra.mrb[0].mxu0 %v903
    %v976 = vpop.f32.mrb[0].mxu0
    %v977 = vadd.f32 0.0, %v976
    %v978 = vpop.f32.mrb[0].mxu0
    %v979 = vadd.f32 0.0, %v978
    %980 = vdwg.mxu0
    %981 = vmatprep.subr.mxu0 0.0
    %982 = vmatpush1.msra.mxu0 %v515
    %983 = vmatprep.subr.mxu0 0.0
    %984 = vmatpush1.msra.mxu0 %v518
    %985 = vmatprep.subr.mxu0 0.0
    %986 = vmatpush1.msra.mxu0 %v521
    %987 = vmatprep.subr.mxu0 0.0
    %988 = vmatpush1.msra.mxu0 %v524
    %989 = vmatprep.subr.mxu0 0.0
    %990 = vmatpush1.msra.mxu0 %v527
    %991 = vmatprep.subr.mxu0 0.0
    %992 = vmatpush1.msra.mxu0 %v530
    %993 = vmatprep.subr.mxu0 0.0
    %994 = vmatpush1.msra.mxu0 %v533
    %995 = vmatprep.subr.mxu0 0.0
    %996 = vmatpush1.msra.mxu0 %v536
    %997 = vmatprep.subr.mxu0 0.0
    %998 = vmatpush1.msra.mxu0 %v539
    %999 = vmatprep.subr.mxu0 0.0
    %1000 = vmatpush1.msra.mxu0 %v542
    %1001 = vmatprep.subr.mxu0 0.0
    %1002 = vmatpush1.msra.mxu0 %v545
    %1003 = vmatprep.subr.mxu0 0.0
    %1004 = vmatpush1.msra.mxu0 %v548
    %1005 = vmatprep.subr.mxu0 0.0
    %1006 = vmatpush1.msra.mxu0 %v551
    %1007 = vmatprep.subr.mxu0 0.0
    %1008 = vmatpush1.msra.mxu0 %v554
    %1009 = vmatprep.subr.mxu0 0.0
    %1010 = vmatpush1.msra.mxu0 %v557
    %1011 = vmatprep.subr.mxu0 0.0
    %1012 = vmatpush1.msra.mxu0 %v560
    %1013 = vmatprep.subr.mxu0 0.0
    %1014 = vmatpush1.msra.mxu0 0.0
    %1015 = vmatprep.subr.mxu0 0.0
    %1016 = vmatpush1.msra.mxu0 0.0
    %1017 = vmatprep.subr.mxu0 0.0
    %1018 = vmatpush1.msra.mxu0 0.0
    %1019 = vmatprep.subr.mxu0 0.0
    %1020 = vmatpush1.msra.mxu0 0.0
    %1021 = vmatprep.subr.mxu0 0.0
    %1022 = vmatpush1.msra.mxu0 0.0
    %1023 = vmatprep.subr.mxu0 0.0
    %1024 = vmatpush1.msra.mxu0 0.0
    %1025 = vmatprep.subr.mxu0 0.0
    %1026 = vmatpush1.msra.mxu0 0.0
    %1027 = vmatprep.subr.mxu0 0.0
    %1028 = vmatpush1.msra.mxu0 0.0
    %1029 = vmatprep.subr.mxu0 0.0
    %1030 = vmatpush1.msra.mxu0 0.0
    %1031 = vmatprep.subr.mxu0 0.0
    %1032 = vmatpush1.msra.mxu0 0.0
    %1033 = vmatprep.subr.mxu0 0.0
    %1034 = vmatpush1.msra.mxu0 0.0
    %1035 = vmatprep.subr.mxu0 0.0
    %1036 = vmatpush1.msra.mxu0 0.0
    %1037 = vmatprep.subr.mxu0 0.0
    %1038 = vmatpush1.msra.mxu0 0.0
    %1039 = vmatprep.subr.mxu0 0.0
    %1040 = vmatpush1.msra.mxu0 0.0
    %1041 = vmatprep.subr.mxu0 0.0
    %1042 = vmatpush1.msra.mxu0 0.0
    %1043 = vmatprep.subr.mxu0 0.0
    %1044 = vmatpush1.msra.mxu0 0.0
    %1045 = vmatprep.mubr.f32.mxu0 0.0
    %1046 = vmatmul.mubr.f32.gmra.mrb[0].mxu0 %v903
    %v1047 = vpop.f32.mrb[0].mxu0
    %v1048 = vadd.f32 0.0, %v1047
    %v1049 = vpop.f32.mrb[0].mxu0
    %1050 = vdwg.mxu0
    %v1051 = vadd.f32 %v907, %v977
    %v1052 = vxor.u32 %v1051, 2147483648
    %v1053 = vmul.f32 %v1052, 1.442695
    %v1054 = vpow.pop %v1053
    %v1055 = vadd.f32 %v1054, 1.0
    %v1056 = vrcp.pop %v1055
    %v1057 = vmul.f32 1.0, %v1056
    %v1058 = vadd.f32 %v908, %v979
    %v1059 = vxor.u32 %v1058, 2147483648
    %v1060 = vmul.f32 %v1059, 1.442695
    %v1061 = vpow.pop %v1060
    %v1062 = vadd.f32 %v1061, 1.0
    %v1063 = vrcp.pop %v1062
    %v1064 = vmul.f32 1.0, %v1063
    %v1065 = vadd.f32 %v1048, %v566
    %v1066 = vmul.f32 %v1057, %v1065
    %v1067 = vadd.f32 %v909, %v1066
    %v1068 = vtanh.pop %v1067
    %v1069 = vsub.f32 %v903, %v1068
    %v1070 = vmul.f32 %v1064, %v1069
    %v1071 = vadd.f32 %v1068, %v1070
    %s1072 = smul.u32 3, 3
    %s1073 = smul.addr %s1072, 8
    %s1074 = scalar_lea.vmem [#allocation2], %s1073
    %v1075 = vld [vmem:[%s1074] sm:$0xff]
    %v1076 = vld [vmem:[%s1074 + $0x8] sm:$0xff]
    %v1077 = vld [vmem:[%s1074 + $0x10] sm:$0xff]
    %1078 = vmatprep.subr.mxu0 %v514
    %1079 = vmatpush1.msra.mxu0 %v513
    %1080 = vmatprep.subr.mxu0 %v517
    %1081 = vmatpush1.msra.mxu0 %v516
    %1082 = vmatprep.subr.mxu0 %v520
    %1083 = vmatpush1.msra.mxu0 %v519
    %1084 = vmatprep.subr.mxu0 %v523
    %1085 = vmatpush1.msra.mxu0 %v522
    %1086 = vmatprep.subr.mxu0 %v526
    %1087 = vmatpush1.msra.mxu0 %v525
    %1088 = vmatprep.subr.mxu0 %v529
    %1089 = vmatpush1.msra.mxu0 %v528
    %1090 = vmatprep.subr.mxu0 %v532
    %1091 = vmatpush1.msra.mxu0 %v531
    %1092 = vmatprep.subr.mxu0 %v535
    %1093 = vmatpush1.msra.mxu0 %v534
    %1094 = vmatprep.subr.mxu0 %v538
    %1095 = vmatpush1.msra.mxu0 %v537
    %1096 = vmatprep.subr.mxu0 %v541
    %1097 = vmatpush1.msra.mxu0 %v540
    %1098 = vmatprep.subr.mxu0 %v544
    %1099 = vmatpush1.msra.mxu0 %v543
    %1100 = vmatprep.subr.mxu0 %v547
    %1101 = vmatpush1.msra.mxu0 %v546
    %1102 = vmatprep.subr.mxu0 %v550
    %1103 = vmatpush1.msra.mxu0 %v549
    %1104 = vmatprep.subr.mxu0 %v553
    %1105 = vmatpush1.msra.mxu0 %v552
    %1106 = vmatprep.subr.mxu0 %v556
    %1107 = vmatpush1.msra.mxu0 %v555
    %1108 = vmatprep.subr.mxu0 %v559
    %1109 = vmatpush1.msra.mxu0 %v558
    %1110 = vmatprep.subr.mxu0 0.0
    %1111 = vmatpush1.msra.mxu0 0.0
    %1112 = vmatprep.subr.mxu0 0.0
    %1113 = vmatpush1.msra.mxu0 0.0
    %1114 = vmatprep.subr.mxu0 0.0
    %1115 = vmatpush1.msra.mxu0 0.0
    %1116 = vmatprep.subr.mxu0 0.0
    %1117 = vmatpush1.msra.mxu0 0.0
    %1118 = vmatprep.subr.mxu0 0.0
    %1119 = vmatpush1.msra.mxu0 0.0
    %1120 = vmatprep.subr.mxu0 0.0
    %1121 = vmatpush1.msra.mxu0 0.0
    %1122 = vmatprep.subr.mxu0 0.0
    %1123 = vmatpush1.msra.mxu0 0.0
    %1124 = vmatprep.subr.mxu0 0.0
    %1125 = vmatpush1.msra.mxu0 0.0
    %1126 = vmatprep.subr.mxu0 0.0
    %1127 = vmatpush1.msra.mxu0 0.0
    %1128 = vmatprep.subr.mxu0 0.0
    %1129 = vmatpush1.msra.mxu0 0.0
    %1130 = vmatprep.subr.mxu0 0.0
    %1131 = vmatpush1.msra.mxu0 0.0
    %1132 = vmatprep.subr.mxu0 0.0
    %1133 = vmatpush1.msra.mxu0 0.0
    %1134 = vmatprep.subr.mxu0 0.0
    %1135 = vmatpush1.msra.mxu0 0.0
    %1136 = vmatprep.subr.mxu0 0.0
    %1137 = vmatpush1.msra.mxu0 0.0
    %1138 = vmatprep.subr.mxu0 0.0
    %1139 = vmatpush1.msra.mxu0 0.0
    %1140 = vmatprep.subr.mxu0 0.0
    %1141 = vmatpush1.msra.mxu0 0.0
    %1142 = vmatprep.mubr.f32.mxu0 0.0
    %1143 = vmatmul.mubr.f32.gmra.mrb[0].mxu0 %v1071
    %v1144 = vpop.f32.mrb[0].mxu0
    %v1145 = vadd.f32 0.0, %v1144
    %v1146 = vpop.f32.mrb[0].mxu0
    %v1147 = vadd.f32 0.0, %v1146
    %1148 = vdwg.mxu0
    %1149 = vmatprep.subr.mxu0 0.0
    %1150 = vmatpush1.msra.mxu0 %v515
    %1151 = vmatprep.subr.mxu0 0.0
    %1152 = vmatpush1.msra.mxu0 %v518
    %1153 = vmatprep.subr.mxu0 0.0
    %1154 = vmatpush1.msra.mxu0 %v521
    %1155 = vmatprep.subr.mxu0 0.0
    %1156 = vmatpush1.msra.mxu0 %v524
    %1157 = vmatprep.subr.mxu0 0.0
    %1158 = vmatpush1.msra.mxu0 %v527
    %1159 = vmatprep.subr.mxu0 0.0
    %1160 = vmatpush1.msra.mxu0 %v530
    %1161 = vmatprep.subr.mxu0 0.0
    %1162 = vmatpush1.msra.mxu0 %v533
    %1163 = vmatprep.subr.mxu0 0.0
    %1164 = vmatpush1.msra.mxu0 %v536
    %1165 = vmatprep.subr.mxu0 0.0
    %1166 = vmatpush1.msra.mxu0 %v539
    %1167 = vmatprep.subr.mxu0 0.0
    %1168 = vmatpush1.msra.mxu0 %v542
    %1169 = vmatprep.subr.mxu0 0.0
    %1170 = vmatpush1.msra.mxu0 %v545
    %1171 = vmatprep.subr.mxu0 0.0
    %1172 = vmatpush1.msra.mxu0 %v548
    %1173 = vmatprep.subr.mxu0 0.0
    %1174 = vmatpush1.msra.mxu0 %v551
    %1175 = vmatprep.subr.mxu0 0.0
    %1176 = vmatpush1.msra.mxu0 %v554
    %1177 = vmatprep.subr.mxu0 0.0
    %1178 = vmatpush1.msra.mxu0 %v557
    %1179 = vmatprep.subr.mxu0 0.0
    %1180 = vmatpush1.msra.mxu0 %v560
    %1181 = vmatprep.subr.mxu0 0.0
    %1182 = vmatpush1.msra.mxu0 0.0
    %1183 = vmatprep.subr.mxu0 0.0
    %1184 = vmatpush1.msra.mxu0 0.0
    %1185 = vmatprep.subr.mxu0 0.0
    %1186 = vmatpush1.msra.mxu0 0.0
    %1187 = vmatprep.subr.mxu0 0.0
    %1188 = vmatpush1.msra.mxu0 0.0
    %1189 = vmatprep.subr.mxu0 0.0
    %1190 = vmatpush1.msra.mxu0 0.0
    %1191 = vmatprep.subr.mxu0 0.0
    %1192 = vmatpush1.msra.mxu0 0.0
    %1193 = vmatprep.subr.mxu0 0.0
    %1194 = vmatpush1.msra.mxu0 0.0
    %1195 = vmatprep.subr.mxu0 0.0
    %1196 = vmatpush1.msra.mxu0 0.0
    %1197 = vmatprep.subr.mxu0 0.0
    %1198 = vmatpush1.msra.mxu0 0.0
    %1199 = vmatprep.subr.mxu0 0.0
    %1200 = vmatpush1.msra.mxu0 0.0
    %1201 = vmatprep.subr.mxu0 0.0
    %1202 = vmatpush1.msra.mxu0 0.0
    %1203 = vmatprep.subr.mxu0 0.0
    %1204 = vmatpush1.msra.mxu0 0.0
    %1205 = vmatprep.subr.mxu0 0.0
    %1206 = vmatpush1.msra.mxu0 0.0
    %1207 = vmatprep.subr.mxu0 0.0
    %1208 = vmatpush1.msra.mxu0 0.0
    %1209 = vmatprep.subr.mxu0 0.0
    %1210 = vmatpush1.msra.mxu0 0.0
    %1211 = vmatprep.subr.mxu0 0.0
    %1212 = vmatpush1.msra.mxu0 0.0
    %1213 = vmatprep.mubr.f32.mxu0 0.0
    %1214 = vmatmul.mubr.f32.gmra.mrb[0].mxu0 %v1071
    %v1215 = vpop.f32.mrb[0].mxu0
    %v1216 = vadd.f32 0.0, %v1215
    %v1217 = vpop.f32.mrb[0].mxu0
    %1218 = vdwg.mxu0
    %v1219 = vadd.f32 %v1075, %v1145
    %v1220 = vxor.u32 %v1219, 2147483648
    %v1221 = vmul.f32 %v1220, 1.442695
    %v1222 = vpow.pop %v1221
    %v1223 = vadd.f32 %v1222, 1.0
    %v1224 = vrcp.pop %v1223
    %v1225 = vmul.f32 1.0, %v1224
    %v1226 = vadd.f32 %v1076, %v1147
    %v1227 = vxor.u32 %v1226, 2147483648
    %v1228 = vmul.f32 %v1227, 1.442695
    %v1229 = vpow.pop %v1228
    %v1230 = vadd.f32 %v1229, 1.0
    %v1231 = vrcp.pop %v1230
    %v1232 = vmul.f32 1.0, %v1231
    %v1233 = vadd.f32 %v1216, %v566
    %v1234 = vmul.f32 %v1225, %v1233
    %v1235 = vadd.f32 %v1077, %v1234
    %v1236 = vtanh.pop %v1235
    %v1237 = vsub.f32 %v1071, %v1236
    %v1238 = vmul.f32 %v1232, %v1237
    %v1239 = vadd.f32 %v1236, %v1238
    %s1240 = smul.u32 4, 3
    %s1241 = smul.addr %s1240, 8
    %s1242 = scalar_lea.vmem [#allocation2], %s1241
    %v1243 = vld [vmem:[%s1242] sm:$0xff]
    %v1244 = vld [vmem:[%s1242 + $0x8] sm:$0xff]
    %v1245 = vld [vmem:[%s1242 + $0x10] sm:$0xff]
    %1246 = vmatprep.subr.mxu0 %v514
    %1247 = vmatpush1.msra.mxu0 %v513
    %1248 = vmatprep.subr.mxu0 %v517
    %1249 = vmatpush1.msra.mxu0 %v516
    %1250 = vmatprep.subr.mxu0 %v520
    %1251 = vmatpush1.msra.mxu0 %v519
    %1252 = vmatprep.subr.mxu0 %v523
    %1253 = vmatpush1.msra.mxu0 %v522
    %1254 = vmatprep.subr.mxu0 %v526
    %1255 = vmatpush1.msra.mxu0 %v525
    %1256 = vmatprep.subr.mxu0 %v529
    %1257 = vmatpush1.msra.mxu0 %v528
    %1258 = vmatprep.subr.mxu0 %v532
    %1259 = vmatpush1.msra.mxu0 %v531
    %1260 = vmatprep.subr.mxu0 %v535
    %1261 = vmatpush1.msra.mxu0 %v534
    %1262 = vmatprep.subr.mxu0 %v538
    %1263 = vmatpush1.msra.mxu0 %v537
    %1264 = vmatprep.subr.mxu0 %v541
    %1265 = vmatpush1.msra.mxu0 %v540
    %1266 = vmatprep.subr.mxu0 %v544
    %1267 = vmatpush1.msra.mxu0 %v543
    %1268 = vmatprep.subr.mxu0 %v547
    %1269 = vmatpush1.msra.mxu0 %v546
    %1270 = vmatprep.subr.mxu0 %v550
    %1271 = vmatpush1.msra.mxu0 %v549
    %1272 = vmatprep.subr.mxu0 %v553
    %1273 = vmatpush1.msra.mxu0 %v552
    %1274 = vmatprep.subr.mxu0 %v556
    %1275 = vmatpush1.msra.mxu0 %v555
    %1276 = vmatprep.subr.mxu0 %v559
    %1277 = vmatpush1.msra.mxu0 %v558
    %1278 = vmatprep.subr.mxu0 0.0
    %1279 = vmatpush1.msra.mxu0 0.0
    %1280 = vmatprep.subr.mxu0 0.0
    %1281 = vmatpush1.msra.mxu0 0.0
    %1282 = vmatprep.subr.mxu0 0.0
    %1283 = vmatpush1.msra.mxu0 0.0
    %1284 = vmatprep.subr.mxu0 0.0
    %1285 = vmatpush1.msra.mxu0 0.0
    %1286 = vmatprep.subr.mxu0 0.0
    %1287 = vmatpush1.msra.mxu0 0.0
    %1288 = vmatprep.subr.mxu0 0.0
    %1289 = vmatpush1.msra.mxu0 0.0
    %1290 = vmatprep.subr.mxu0 0.0
    %1291 = vmatpush1.msra.mxu0 0.0
    %1292 = vmatprep.subr.mxu0 0.0
    %1293 = vmatpush1.msra.mxu0 0.0
    %1294 = vmatprep.subr.mxu0 0.0
    %1295 = vmatpush1.msra.mxu0 0.0
    %1296 = vmatprep.subr.mxu0 0.0
    %1297 = vmatpush1.msra.mxu0 0.0
    %1298 = vmatprep.subr.mxu0 0.0
    %1299 = vmatpush1.msra.mxu0 0.0
    %1300 = vmatprep.subr.mxu0 0.0
    %1301 = vmatpush1.msra.mxu0 0.0
    %1302 = vmatprep.subr.mxu0 0.0
    %1303 = vmatpush1.msra.mxu0 0.0
    %1304 = vmatprep.subr.mxu0 0.0
    %1305 = vmatpush1.msra.mxu0 0.0
    %1306 = vmatprep.subr.mxu0 0.0
    %1307 = vmatpush1.msra.mxu0 0.0
    %1308 = vmatprep.subr.mxu0 0.0
    %1309 = vmatpush1.msra.mxu0 0.0
    %1310 = vmatprep.mubr.f32.mxu0 0.0
    %1311 = vmatmul.mubr.f32.gmra.mrb[0].mxu0 %v1239
    %v1312 = vpop.f32.mrb[0].mxu0
    %v1313 = vadd.f32 0.0, %v1312
    %v1314 = vpop.f32.mrb[0].mxu0
    %v1315 = vadd.f32 0.0, %v1314
    %1316 = vdwg.mxu0
    %1317 = vmatprep.subr.mxu0 0.0
    %1318 = vmatpush1.msra.mxu0 %v515
    %1319 = vmatprep.subr.mxu0 0.0
    %1320 = vmatpush1.msra.mxu0 %v518
    %1321 = vmatprep.subr.mxu0 0.0
    %1322 = vmatpush1.msra.mxu0 %v521
    %1323 = vmatprep.subr.mxu0 0.0
    %1324 = vmatpush1.msra.mxu0 %v524
    %1325 = vmatprep.subr.mxu0 0.0
    %1326 = vmatpush1.msra.mxu0 %v527
    %1327 = vmatprep.subr.mxu0 0.0
    %1328 = vmatpush1.msra.mxu0 %v530
    %1329 = vmatprep.subr.mxu0 0.0
    %1330 = vmatpush1.msra.mxu0 %v533
    %1331 = vmatprep.subr.mxu0 0.0
    %1332 = vmatpush1.msra.mxu0 %v536
    %1333 = vmatprep.subr.mxu0 0.0
    %1334 = vmatpush1.msra.mxu0 %v539
    %1335 = vmatprep.subr.mxu0 0.0
    %1336 = vmatpush1.msra.mxu0 %v542
    %1337 = vmatprep.subr.mxu0 0.0
    %1338 = vmatpush1.msra.mxu0 %v545
    %1339 = vmatprep.subr.mxu0 0.0
    %1340 = vmatpush1.msra.mxu0 %v548
    %1341 = vmatprep.subr.mxu0 0.0
    %1342 = vmatpush1.msra.mxu0 %v551
    %1343 = vmatprep.subr.mxu0 0.0
    %1344 = vmatpush1.msra.mxu0 %v554
    %1345 = vmatprep.subr.mxu0 0.0
    %1346 = vmatpush1.msra.mxu0 %v557
    %1347 = vmatprep.subr.mxu0 0.0
    %1348 = vmatpush1.msra.mxu0 %v560
    %1349 = vmatprep.subr.mxu0 0.0
    %1350 = vmatpush1.msra.mxu0 0.0
    %1351 = vmatprep.subr.mxu0 0.0
    %1352 = vmatpush1.msra.mxu0 0.0
    %1353 = vmatprep.subr.mxu0 0.0
    %1354 = vmatpush1.msra.mxu0 0.0
    %1355 = vmatprep.subr.mxu0 0.0
    %1356 = vmatpush1.msra.mxu0 0.0
    %1357 = vmatprep.subr.mxu0 0.0
    %1358 = vmatpush1.msra.mxu0 0.0
    %1359 = vmatprep.subr.mxu0 0.0
    %1360 = vmatpush1.msra.mxu0 0.0
    %1361 = vmatprep.subr.mxu0 0.0
    %1362 = vmatpush1.msra.mxu0 0.0
    %1363 = vmatprep.subr.mxu0 0.0
    %1364 = vmatpush1.msra.mxu0 0.0
    %1365 = vmatprep.subr.mxu0 0.0
    %1366 = vmatpush1.msra.mxu0 0.0
    %1367 = vmatprep.subr.mxu0 0.0
    %1368 = vmatpush1.msra.mxu0 0.0
    %1369 = vmatprep.subr.mxu0 0.0
    %1370 = vmatpush1.msra.mxu0 0.0
    %1371 = vmatprep.subr.mxu0 0.0
    %1372 = vmatpush1.msra.mxu0 0.0
    %1373 = vmatprep.subr.mxu0 0.0
    %1374 = vmatpush1.msra.mxu0 0.0
    %1375 = vmatprep.subr.mxu0 0.0
    %1376 = vmatpush1.msra.mxu0 0.0
    %1377 = vmatprep.subr.mxu0 0.0
    %1378 = vmatpush1.msra.mxu0 0.0
    %1379 = vmatprep.subr.mxu0 0.0
    %1380 = vmatpush1.msra.mxu0 0.0
    %1381 = vmatprep.mubr.f32.mxu0 0.0
    %1382 = vmatmul.mubr.f32.gmra.mrb[0].mxu0 %v1239
    %v1383 = vpop.f32.mrb[0].mxu0
    %v1384 = vadd.f32 0.0, %v1383
    %v1385 = vpop.f32.mrb[0].mxu0
    %1386 = vdwg.mxu0
    %v1387 = vadd.f32 %v1243, %v1313
    %v1388 = vxor.u32 %v1387, 2147483648
    %v1389 = vmul.f32 %v1388, 1.442695
    %v1390 = vpow.pop %v1389
    %v1391 = vadd.f32 %v1390, 1.0
    %v1392 = vrcp.pop %v1391
    %v1393 = vmul.f32 1.0, %v1392
    %v1394 = vadd.f32 %v1244, %v1315
    %v1395 = vxor.u32 %v1394, 2147483648
    %v1396 = vmul.f32 %v1395, 1.442695
    %v1397 = vpow.pop %v1396
    %v1398 = vadd.f32 %v1397, 1.0
    %v1399 = vrcp.pop %v1398
    %v1400 = vmul.f32 1.0, %v1399
    %v1401 = vadd.f32 %v1384, %v566
    %v1402 = vmul.f32 %v1393, %v1401
    %v1403 = vadd.f32 %v1245, %v1402
    %v1404 = vtanh.pop %v1403
    %v1405 = vsub.f32 %v1239, %v1404
    %v1406 = vmul.f32 %v1400, %v1405
    %v1407 = vadd.f32 %v1404, %v1406
    %s1408 = smul.u32 5, 3
    %s1409 = smul.addr %s1408, 8
    %s1410 = scalar_lea.vmem [#allocation2], %s1409
    %v1411 = vld [vmem:[%s1410] sm:$0xff]
    %v1412 = vld [vmem:[%s1410 + $0x8] sm:$0xff]
    %v1413 = vld [vmem:[%s1410 + $0x10] sm:$0xff]
    %1414 = vmatprep.subr.mxu0 %v514
    %1415 = vmatpush1.msra.mxu0 %v513
    %1416 = vmatprep.subr.mxu0 %v517
    %1417 = vmatpush1.msra.mxu0 %v516
    %1418 = vmatprep.subr.mxu0 %v520
    %1419 = vmatpush1.msra.mxu0 %v519
    %1420 = vmatprep.subr.mxu0 %v523
    %1421 = vmatpush1.msra.mxu0 %v522
    %1422 = vmatprep.subr.mxu0 %v526
    %1423 = vmatpush1.msra.mxu0 %v525
    %1424 = vmatprep.subr.mxu0 %v529
    %1425 = vmatpush1.msra.mxu0 %v528
    %1426 = vmatprep.subr.mxu0 %v532
    %1427 = vmatpush1.msra.mxu0 %v531
    %1428 = vmatprep.subr.mxu0 %v535
    %1429 = vmatpush1.msra.mxu0 %v534
    %1430 = vmatprep.subr.mxu0 %v538
    %1431 = vmatpush1.msra.mxu0 %v537
    %1432 = vmatprep.subr.mxu0 %v541
    %1433 = vmatpush1.msra.mxu0 %v540
    %1434 = vmatprep.subr.mxu0 %v544
    %1435 = vmatpush1.msra.mxu0 %v543
    %1436 = vmatprep.subr.mxu0 %v547
    %1437 = vmatpush1.msra.mxu0 %v546
    %1438 = vmatprep.subr.mxu0 %v550
    %1439 = vmatpush1.msra.mxu0 %v549
    %1440 = vmatprep.subr.mxu0 %v553
    %1441 = vmatpush1.msra.mxu0 %v552
    %1442 = vmatprep.subr.mxu0 %v556
    %1443 = vmatpush1.msra.mxu0 %v555
    %1444 = vmatprep.subr.mxu0 %v559
    %1445 = vmatpush1.msra.mxu0 %v558
    %1446 = vmatprep.subr.mxu0 0.0
    %1447 = vmatpush1.msra.mxu0 0.0
    %1448 = vmatprep.subr.mxu0 0.0
    %1449 = vmatpush1.msra.mxu0 0.0
    %1450 = vmatprep.subr.mxu0 0.0
    %1451 = vmatpush1.msra.mxu0 0.0
    %1452 = vmatprep.subr.mxu0 0.0
    %1453 = vmatpush1.msra.mxu0 0.0
    %1454 = vmatprep.subr.mxu0 0.0
    %1455 = vmatpush1.msra.mxu0 0.0
    %1456 = vmatprep.subr.mxu0 0.0
    %1457 = vmatpush1.msra.mxu0 0.0
    %1458 = vmatprep.subr.mxu0 0.0
    %1459 = vmatpush1.msra.mxu0 0.0
    %1460 = vmatprep.subr.mxu0 0.0
    %1461 = vmatpush1.msra.mxu0 0.0
    %1462 = vmatprep.subr.mxu0 0.0
    %1463 = vmatpush1.msra.mxu0 0.0
    %1464 = vmatprep.subr.mxu0 0.0
    %1465 = vmatpush1.msra.mxu0 0.0
    %1466 = vmatprep.subr.mxu0 0.0
    %1467 = vmatpush1.msra.mxu0 0.0
    %1468 = vmatprep.subr.mxu0 0.0
    %1469 = vmatpush1.msra.mxu0 0.0
    %1470 = vmatprep.subr.mxu0 0.0
    %1471 = vmatpush1.msra.mxu0 0.0
    %1472 = vmatprep.subr.mxu0 0.0
    %1473 = vmatpush1.msra.mxu0 0.0
    %1474 = vmatprep.subr.mxu0 0.0
    %1475 = vmatpush1.msra.mxu0 0.0
    %1476 = vmatprep.subr.mxu0 0.0
    %1477 = vmatpush1.msra.mxu0 0.0
    %1478 = vmatprep.mubr.f32.mxu0 0.0
    %1479 = vmatmul.mubr.f32.gmra.mrb[0].mxu0 %v1407
    %v1480 = vpop.f32.mrb[0].mxu0
    %v1481 = vadd.f32 0.0, %v1480
    %v1482 = vpop.f32.mrb[0].mxu0
    %v1483 = vadd.f32 0.0, %v1482
    %1484 = vdwg.mxu0
    %1485 = vmatprep.subr.mxu0 0.0
    %1486 = vmatpush1.msra.mxu0 %v515
    %1487 = vmatprep.subr.mxu0 0.0
    %1488 = vmatpush1.msra.mxu0 %v518
    %1489 = vmatprep.subr.mxu0 0.0
    %1490 = vmatpush1.msra.mxu0 %v521
    %1491 = vmatprep.subr.mxu0 0.0
    %1492 = vmatpush1.msra.mxu0 %v524
    %1493 = vmatprep.subr.mxu0 0.0
    %1494 = vmatpush1.msra.mxu0 %v527
    %1495 = vmatprep.subr.mxu0 0.0
    %1496 = vmatpush1.msra.mxu0 %v530
    %1497 = vmatprep.subr.mxu0 0.0
    %1498 = vmatpush1.msra.mxu0 %v533
    %1499 = vmatprep.subr.mxu0 0.0
    %1500 = vmatpush1.msra.mxu0 %v536
    %1501 = vmatprep.subr.mxu0 0.0
    %1502 = vmatpush1.msra.mxu0 %v539
    %1503 = vmatprep.subr.mxu0 0.0
    %1504 = vmatpush1.msra.mxu0 %v542
    %1505 = vmatprep.subr.mxu0 0.0
    %1506 = vmatpush1.msra.mxu0 %v545
    %1507 = vmatprep.subr.mxu0 0.0
    %1508 = vmatpush1.msra.mxu0 %v548
    %1509 = vmatprep.subr.mxu0 0.0
    %1510 = vmatpush1.msra.mxu0 %v551
    %1511 = vmatprep.subr.mxu0 0.0
    %1512 = vmatpush1.msra.mxu0 %v554
    %1513 = vmatprep.subr.mxu0 0.0
    %1514 = vmatpush1.msra.mxu0 %v557
    %1515 = vmatprep.subr.mxu0 0.0
    %1516 = vmatpush1.msra.mxu0 %v560
    %1517 = vmatprep.subr.mxu0 0.0
    %1518 = vmatpush1.msra.mxu0 0.0
    %1519 = vmatprep.subr.mxu0 0.0
    %1520 = vmatpush1.msra.mxu0 0.0
    %1521 = vmatprep.subr.mxu0 0.0
    %1522 = vmatpush1.msra.mxu0 0.0
    %1523 = vmatprep.subr.mxu0 0.0
    %1524 = vmatpush1.msra.mxu0 0.0
    %1525 = vmatprep.subr.mxu0 0.0
    %1526 = vmatpush1.msra.mxu0 0.0
    %1527 = vmatprep.subr.mxu0 0.0
    %1528 = vmatpush1.msra.mxu0 0.0
    %1529 = vmatprep.subr.mxu0 0.0
    %1530 = vmatpush1.msra.mxu0 0.0
    %1531 = vmatprep.subr.mxu0 0.0
    %1532 = vmatpush1.msra.mxu0 0.0
    %1533 = vmatprep.subr.mxu0 0.0
    %1534 = vmatpush1.msra.mxu0 0.0
    %1535 = vmatprep.subr.mxu0 0.0
    %1536 = vmatpush1.msra.mxu0 0.0
    %1537 = vmatprep.subr.mxu0 0.0
    %1538 = vmatpush1.msra.mxu0 0.0
    %1539 = vmatprep.subr.mxu0 0.0
    %1540 = vmatpush1.msra.mxu0 0.0
    %1541 = vmatprep.subr.mxu0 0.0
    %1542 = vmatpush1.msra.mxu0 0.0
    %1543 = vmatprep.subr.mxu0 0.0
    %1544 = vmatpush1.msra.mxu0 0.0
    %1545 = vmatprep.subr.mxu0 0.0
    %1546 = vmatpush1.msra.mxu0 0.0
    %1547 = vmatprep.subr.mxu0 0.0
    %1548 = vmatpush1.msra.mxu0 0.0
    %1549 = vmatprep.mubr.f32.mxu0 0.0
    %1550 = vmatmul.mubr.f32.gmra.mrb[0].mxu0 %v1407
    %v1551 = vpop.f32.mrb[0].mxu0
    %v1552 = vadd.f32 0.0, %v1551
    %v1553 = vpop.f32.mrb[0].mxu0
    %1554 = vdwg.mxu0
    %v1555 = vadd.f32 %v1411, %v1481
    %v1556 = vxor.u32 %v1555, 2147483648
    %v1557 = vmul.f32 %v1556, 1.442695
    %v1558 = vpow.pop %v1557
    %v1559 = vadd.f32 %v1558, 1.0
    %v1560 = vrcp.pop %v1559
    %v1561 = vmul.f32 1.0, %v1560
    %v1562 = vadd.f32 %v1412, %v1483
    %v1563 = vxor.u32 %v1562, 2147483648
    %v1564 = vmul.f32 %v1563, 1.442695
    %v1565 = vpow.pop %v1564
    %v1566 = vadd.f32 %v1565, 1.0
    %v1567 = vrcp.pop %v1566
    %v1568 = vmul.f32 1.0, %v1567
    %v1569 = vadd.f32 %v1552, %v566
    %v1570 = vmul.f32 %v1561, %v1569
    %v1571 = vadd.f32 %v1413, %v1570
    %v1572 = vtanh.pop %v1571
    %v1573 = vsub.f32 %v1407, %v1572
    %v1574 = vmul.f32 %v1568, %v1573
    %v1575 = vadd.f32 %v1572, %v1574
    %s1576 = smul.u32 6, 3
    %s1577 = smul.addr %s1576, 8
    %s1578 = scalar_lea.vmem [#allocation2], %s1577
    %v1579 = vld [vmem:[%s1578] sm:$0xff]
    %v1580 = vld [vmem:[%s1578 + $0x8] sm:$0xff]
    %v1581 = vld [vmem:[%s1578 + $0x10] sm:$0xff]
    %1582 = vmatprep.subr.mxu0 %v514
    %1583 = vmatpush1.msra.mxu0 %v513
    %1584 = vmatprep.subr.mxu0 %v517
    %1585 = vmatpush1.msra.mxu0 %v516
    %1586 = vmatprep.subr.mxu0 %v520
    %1587 = vmatpush1.msra.mxu0 %v519
    %1588 = vmatprep.subr.mxu0 %v523
    %1589 = vmatpush1.msra.mxu0 %v522
    %1590 = vmatprep.subr.mxu0 %v526
    %1591 = vmatpush1.msra.mxu0 %v525
    %1592 = vmatprep.subr.mxu0 %v529
    %1593 = vmatpush1.msra.mxu0 %v528
    %1594 = vmatprep.subr.mxu0 %v532
    %1595 = vmatpush1.msra.mxu0 %v531
    %1596 = vmatprep.subr.mxu0 %v535
    %1597 = vmatpush1.msra.mxu0 %v534
    %1598 = vmatprep.subr.mxu0 %v538
    %1599 = vmatpush1.msra.mxu0 %v537
    %1600 = vmatprep.subr.mxu0 %v541
    %1601 = vmatpush1.msra.mxu0 %v540
    %1602 = vmatprep.subr.mxu0 %v544
    %1603 = vmatpush1.msra.mxu0 %v543
    %1604 = vmatprep.subr.mxu0 %v547
    %1605 = vmatpush1.msra.mxu0 %v546
    %1606 = vmatprep.subr.mxu0 %v550
    %1607 = vmatpush1.msra.mxu0 %v549
    %1608 = vmatprep.subr.mxu0 %v553
    %1609 = vmatpush1.msra.mxu0 %v552
    %1610 = vmatprep.subr.mxu0 %v556
    %1611 = vmatpush1.msra.mxu0 %v555
    %1612 = vmatprep.subr.mxu0 %v559
    %1613 = vmatpush1.msra.mxu0 %v558
    %1614 = vmatprep.subr.mxu0 0.0
    %1615 = vmatpush1.msra.mxu0 0.0
    %1616 = vmatprep.subr.mxu0 0.0
    %1617 = vmatpush1.msra.mxu0 0.0
    %1618 = vmatprep.subr.mxu0 0.0
    %1619 = vmatpush1.msra.mxu0 0.0
    %1620 = vmatprep.subr.mxu0 0.0
    %1621 = vmatpush1.msra.mxu0 0.0
    %1622 = vmatprep.subr.mxu0 0.0
    %1623 = vmatpush1.msra.mxu0 0.0
    %1624 = vmatprep.subr.mxu0 0.0
    %1625 = vmatpush1.msra.mxu0 0.0
    %1626 = vmatprep.subr.mxu0 0.0
    %1627 = vmatpush1.msra.mxu0 0.0
    %1628 = vmatprep.subr.mxu0 0.0
    %1629 = vmatpush1.msra.mxu0 0.0
    %1630 = vmatprep.subr.mxu0 0.0
    %1631 = vmatpush1.msra.mxu0 0.0
    %1632 = vmatprep.subr.mxu0 0.0
    %1633 = vmatpush1.msra.mxu0 0.0
    %1634 = vmatprep.subr.mxu0 0.0
    %1635 = vmatpush1.msra.mxu0 0.0
    %1636 = vmatprep.subr.mxu0 0.0
    %1637 = vmatpush1.msra.mxu0 0.0
    %1638 = vmatprep.subr.mxu0 0.0
    %1639 = vmatpush1.msra.mxu0 0.0
    %1640 = vmatprep.subr.mxu0 0.0
    %1641 = vmatpush1.msra.mxu0 0.0
    %1642 = vmatprep.subr.mxu0 0.0
    %1643 = vmatpush1.msra.mxu0 0.0
    %1644 = vmatprep.subr.mxu0 0.0
    %1645 = vmatpush1.msra.mxu0 0.0
    %1646 = vmatprep.mubr.f32.mxu0 0.0
    %1647 = vmatmul.mubr.f32.gmra.mrb[0].mxu0 %v1575
    %v1648 = vpop.f32.mrb[0].mxu0
    %v1649 = vadd.f32 0.0, %v1648
    %v1650 = vpop.f32.mrb[0].mxu0
    %v1651 = vadd.f32 0.0, %v1650
    %1652 = vdwg.mxu0
    %1653 = vmatprep.subr.mxu0 0.0
    %1654 = vmatpush1.msra.mxu0 %v515
    %1655 = vmatprep.subr.mxu0 0.0
    %1656 = vmatpush1.msra.mxu0 %v518
    %1657 = vmatprep.subr.mxu0 0.0
    %1658 = vmatpush1.msra.mxu0 %v521
    %1659 = vmatprep.subr.mxu0 0.0
    %1660 = vmatpush1.msra.mxu0 %v524
    %1661 = vmatprep.subr.mxu0 0.0
    %1662 = vmatpush1.msra.mxu0 %v527
    %1663 = vmatprep.subr.mxu0 0.0
    %1664 = vmatpush1.msra.mxu0 %v530
    %1665 = vmatprep.subr.mxu0 0.0
    %1666 = vmatpush1.msra.mxu0 %v533
    %1667 = vmatprep.subr.mxu0 0.0
    %1668 = vmatpush1.msra.mxu0 %v536
    %1669 = vmatprep.subr.mxu0 0.0
    %1670 = vmatpush1.msra.mxu0 %v539
    %1671 = vmatprep.subr.mxu0 0.0
    %1672 = vmatpush1.msra.mxu0 %v542
    %1673 = vmatprep.subr.mxu0 0.0
    %1674 = vmatpush1.msra.mxu0 %v545
    %1675 = vmatprep.subr.mxu0 0.0
    %1676 = vmatpush1.msra.mxu0 %v548
    %1677 = vmatprep.subr.mxu0 0.0
    %1678 = vmatpush1.msra.mxu0 %v551
    %1679 = vmatprep.subr.mxu0 0.0
    %1680 = vmatpush1.msra.mxu0 %v554
    %1681 = vmatprep.subr.mxu0 0.0
    %1682 = vmatpush1.msra.mxu0 %v557
    %1683 = vmatprep.subr.mxu0 0.0
    %1684 = vmatpush1.msra.mxu0 %v560
    %1685 = vmatprep.subr.mxu0 0.0
    %1686 = vmatpush1.msra.mxu0 0.0
    %1687 = vmatprep.subr.mxu0 0.0
    %1688 = vmatpush1.msra.mxu0 0.0
    %1689 = vmatprep.subr.mxu0 0.0
    %1690 = vmatpush1.msra.mxu0 0.0
    %1691 = vmatprep.subr.mxu0 0.0
    %1692 = vmatpush1.msra.mxu0 0.0
    %1693 = vmatprep.subr.mxu0 0.0
    %1694 = vmatpush1.msra.mxu0 0.0
    %1695 = vmatprep.subr.mxu0 0.0
    %1696 = vmatpush1.msra.mxu0 0.0
    %1697 = vmatprep.subr.mxu0 0.0
    %1698 = vmatpush1.msra.mxu0 0.0
    %1699 = vmatprep.subr.mxu0 0.0
    %1700 = vmatpush1.msra.mxu0 0.0
    %1701 = vmatprep.subr.mxu0 0.0
    %1702 = vmatpush1.msra.mxu0 0.0
    %1703 = vmatprep.subr.mxu0 0.0
    %1704 = vmatpush1.msra.mxu0 0.0
    %1705 = vmatprep.subr.mxu0 0.0
    %1706 = vmatpush1.msra.mxu0 0.0
    %1707 = vmatprep.subr.mxu0 0.0
    %1708 = vmatpush1.msra.mxu0 0.0
    %1709 = vmatprep.subr.mxu0 0.0
    %1710 = vmatpush1.msra.mxu0 0.0
    %1711 = vmatprep.subr.mxu0 0.0
    %1712 = vmatpush1.msra.mxu0 0.0
    %1713 = vmatprep.subr.mxu0 0.0
    %1714 = vmatpush1.msra.mxu0 0.0
    %1715 = vmatprep.subr.mxu0 0.0
    %1716 = vmatpush1.msra.mxu0 0.0
    %1717 = vmatprep.mubr.f32.mxu0 0.0
    %1718 = vmatmul.mubr.f32.gmra.mrb[0].mxu0 %v1575
    %v1719 = vpop.f32.mrb[0].mxu0
    %v1720 = vadd.f32 0.0, %v1719
    %v1721 = vpop.f32.mrb[0].mxu0
    %1722 = vdwg.mxu0
    %v1723 = vadd.f32 %v1579, %v1649
    %v1724 = vxor.u32 %v1723, 2147483648
    %v1725 = vmul.f32 %v1724, 1.442695
    %v1726 = vpow.pop %v1725
    %v1727 = vadd.f32 %v1726, 1.0
    %v1728 = vrcp.pop %v1727
    %v1729 = vmul.f32 1.0, %v1728
    %v1730 = vadd.f32 %v1580, %v1651
    %v1731 = vxor.u32 %v1730, 2147483648
    %v1732 = vmul.f32 %v1731, 1.442695
    %v1733 = vpow.pop %v1732
    %v1734 = vadd.f32 %v1733, 1.0
    %v1735 = vrcp.pop %v1734
    %v1736 = vmul.f32 1.0, %v1735
    %v1737 = vadd.f32 %v1720, %v566
    %v1738 = vmul.f32 %v1729, %v1737
    %v1739 = vadd.f32 %v1581, %v1738
    %v1740 = vtanh.pop %v1739
    %v1741 = vsub.f32 %v1575, %v1740
    %v1742 = vmul.f32 %v1736, %v1741
    %v1743 = vadd.f32 %v1740, %v1742
    %s1744 = smul.u32 7, 3
    %s1745 = smul.addr %s1744, 8
    %s1746 = scalar_lea.vmem [#allocation2], %s1745
    %v1747 = vld [vmem:[%s1746] sm:$0xff]
    %v1748 = vld [vmem:[%s1746 + $0x8] sm:$0xff]
    %v1749 = vld [vmem:[%s1746 + $0x10] sm:$0xff]
    %1750 = vmatprep.subr.mxu0 %v514
    %1751 = vmatpush1.msra.mxu0 %v513
    %1752 = vmatprep.subr.mxu0 %v517
    %1753 = vmatpush1.msra.mxu0 %v516
    %1754 = vmatprep.subr.mxu0 %v520
    %1755 = vmatpush1.msra.mxu0 %v519
    %1756 = vmatprep.subr.mxu0 %v523
    %1757 = vmatpush1.msra.mxu0 %v522
    %1758 = vmatprep.subr.mxu0 %v526
    %1759 = vmatpush1.msra.mxu0 %v525
    %1760 = vmatprep.subr.mxu0 %v529
    %1761 = vmatpush1.msra.mxu0 %v528
    %1762 = vmatprep.subr.mxu0 %v532
    %1763 = vmatpush1.msra.mxu0 %v531
    %1764 = vmatprep.subr.mxu0 %v535
    %1765 = vmatpush1.msra.mxu0 %v534
    %1766 = vmatprep.subr.mxu0 %v538
    %1767 = vmatpush1.msra.mxu0 %v537
    %1768 = vmatprep.subr.mxu0 %v541
    %1769 = vmatpush1.msra.mxu0 %v540
    %1770 = vmatprep.subr.mxu0 %v544
    %1771 = vmatpush1.msra.mxu0 %v543
    %1772 = vmatprep.subr.mxu0 %v547
    %1773 = vmatpush1.msra.mxu0 %v546
    %1774 = vmatprep.subr.mxu0 %v550
    %1775 = vmatpush1.msra.mxu0 %v549
    %1776 = vmatprep.subr.mxu0 %v553
    %1777 = vmatpush1.msra.mxu0 %v552
    %1778 = vmatprep.subr.mxu0 %v556
    %1779 = vmatpush1.msra.mxu0 %v555
    %1780 = vmatprep.subr.mxu0 %v559
    %1781 = vmatpush1.msra.mxu0 %v558
    %1782 = vmatprep.subr.mxu0 0.0
    %1783 = vmatpush1.msra.mxu0 0.0
    %1784 = vmatprep.subr.mxu0 0.0
    %1785 = vmatpush1.msra.mxu0 0.0
    %1786 = vmatprep.subr.mxu0 0.0
    %1787 = vmatpush1.msra.mxu0 0.0
    %1788 = vmatprep.subr.mxu0 0.0
    %1789 = vmatpush1.msra.mxu0 0.0
    %1790 = vmatprep.subr.mxu0 0.0
    %1791 = vmatpush1.msra.mxu0 0.0
    %1792 = vmatprep.subr.mxu0 0.0
    %1793 = vmatpush1.msra.mxu0 0.0
    %1794 = vmatprep.subr.mxu0 0.0
    %1795 = vmatpush1.msra.mxu0 0.0
    %1796 = vmatprep.subr.mxu0 0.0
    %1797 = vmatpush1.msra.mxu0 0.0
    %1798 = vmatprep.subr.mxu0 0.0
    %1799 = vmatpush1.msra.mxu0 0.0
    %1800 = vmatprep.subr.mxu0 0.0
    %1801 = vmatpush1.msra.mxu0 0.0
    %1802 = vmatprep.subr.mxu0 0.0
    %1803 = vmatpush1.msra.mxu0 0.0
    %1804 = vmatprep.subr.mxu0 0.0
    %1805 = vmatpush1.msra.mxu0 0.0
    %1806 = vmatprep.subr.mxu0 0.0
    %1807 = vmatpush1.msra.mxu0 0.0
    %1808 = vmatprep.subr.mxu0 0.0
    %1809 = vmatpush1.msra.mxu0 0.0
    %1810 = vmatprep.subr.mxu0 0.0
    %1811 = vmatpush1.msra.mxu0 0.0
    %1812 = vmatprep.subr.mxu0 0.0
    %1813 = vmatpush1.msra.mxu0 0.0
    %1814 = vmatprep.mubr.f32.mxu0 0.0
    %1815 = vmatmul.mubr.f32.gmra.mrb[0].mxu0 %v1743
    %v1816 = vpop.f32.mrb[0].mxu0
    %v1817 = vadd.f32 0.0, %v1816
    %v1818 = vpop.f32.mrb[0].mxu0
    %v1819 = vadd.f32 0.0, %v1818
    %1820 = vdwg.mxu0
    %1821 = vmatprep.subr.mxu0 0.0
    %1822 = vmatpush1.msra.mxu0 %v515
    %1823 = vmatprep.subr.mxu0 0.0
    %1824 = vmatpush1.msra.mxu0 %v518
    %1825 = vmatprep.subr.mxu0 0.0
    %1826 = vmatpush1.msra.mxu0 %v521
    %1827 = vmatprep.subr.mxu0 0.0
    %1828 = vmatpush1.msra.mxu0 %v524
    %1829 = vmatprep.subr.mxu0 0.0
    %1830 = vmatpush1.msra.mxu0 %v527
    %1831 = vmatprep.subr.mxu0 0.0
    %1832 = vmatpush1.msra.mxu0 %v530
    %1833 = vmatprep.subr.mxu0 0.0
    %1834 = vmatpush1.msra.mxu0 %v533
    %1835 = vmatprep.subr.mxu0 0.0
    %1836 = vmatpush1.msra.mxu0 %v536
    %1837 = vmatprep.subr.mxu0 0.0
    %1838 = vmatpush1.msra.mxu0 %v539
    %1839 = vmatprep.subr.mxu0 0.0
    %1840 = vmatpush1.msra.mxu0 %v542
    %1841 = vmatprep.subr.mxu0 0.0
    %1842 = vmatpush1.msra.mxu0 %v545
    %1843 = vmatprep.subr.mxu0 0.0
    %1844 = vmatpush1.msra.mxu0 %v548
    %1845 = vmatprep.subr.mxu0 0.0
    %1846 = vmatpush1.msra.mxu0 %v551
    %1847 = vmatprep.subr.mxu0 0.0
    %1848 = vmatpush1.msra.mxu0 %v554
    %1849 = vmatprep.subr.mxu0 0.0
    %1850 = vmatpush1.msra.mxu0 %v557
    %1851 = vmatprep.subr.mxu0 0.0
    %1852 = vmatpush1.msra.mxu0 %v560
    %1853 = vmatprep.subr.mxu0 0.0
    %1854 = vmatpush1.msra.mxu0 0.0
    %1855 = vmatprep.subr.mxu0 0.0
    %1856 = vmatpush1.msra.mxu0 0.0
    %1857 = vmatprep.subr.mxu0 0.0
    %1858 = vmatpush1.msra.mxu0 0.0
    %1859 = vmatprep.subr.mxu0 0.0
    %1860 = vmatpush1.msra.mxu0 0.0
    %1861 = vmatprep.subr.mxu0 0.0
    %1862 = vmatpush1.msra.mxu0 0.0
    %1863 = vmatprep.subr.mxu0 0.0
    %1864 = vmatpush1.msra.mxu0 0.0
    %1865 = vmatprep.subr.mxu0 0.0
    %1866 = vmatpush1.msra.mxu0 0.0
    %1867 = vmatprep.subr.mxu0 0.0
    %1868 = vmatpush1.msra.mxu0 0.0
    %1869 = vmatprep.subr.mxu0 0.0
    %1870 = vmatpush1.msra.mxu0 0.0
    %1871 = vmatprep.subr.mxu0 0.0
    %1872 = vmatpush1.msra.mxu0 0.0
    %1873 = vmatprep.subr.mxu0 0.0
    %1874 = vmatpush1.msra.mxu0 0.0
    %1875 = vmatprep.subr.mxu0 0.0
    %1876 = vmatpush1.msra.mxu0 0.0
    %1877 = vmatprep.subr.mxu0 0.0
    %1878 = vmatpush1.msra.mxu0 0.0
    %1879 = vmatprep.subr.mxu0 0.0
    %1880 = vmatpush1.msra.mxu0 0.0
    %1881 = vmatprep.subr.mxu0 0.0
    %1882 = vmatpush1.msra.mxu0 0.0
    %1883 = vmatprep.subr.mxu0 0.0
    %1884 = vmatpush1.msra.mxu0 0.0
    %1885 = vmatprep.mubr.f32.mxu0 0.0
    %1886 = vmatmul.mubr.f32.gmra.mrb[0].mxu0 %v1743
    %v1887 = vpop.f32.mrb[0].mxu0
    %v1888 = vadd.f32 0.0, %v1887
    %v1889 = vpop.f32.mrb[0].mxu0
    %1890 = vdwg.mxu0
    %v1891 = vadd.f32 %v1747, %v1817
    %v1892 = vxor.u32 %v1891, 2147483648
    %v1893 = vmul.f32 %v1892, 1.442695
    %v1894 = vpow.pop %v1893
    %v1895 = vadd.f32 %v1894, 1.0
    %v1896 = vrcp.pop %v1895
    %v1897 = vmul.f32 1.0, %v1896
    %v1898 = vadd.f32 %v1748, %v1819
    %v1899 = vxor.u32 %v1898, 2147483648
    %v1900 = vmul.f32 %v1899, 1.442695
    %v1901 = vpow.pop %v1900
    %v1902 = vadd.f32 %v1901, 1.0
    %v1903 = vrcp.pop %v1902
    %v1904 = vmul.f32 1.0, %v1903
    %v1905 = vadd.f32 %v1888, %v566
    %v1906 = vmul.f32 %v1897, %v1905
    %v1907 = vadd.f32 %v1749, %v1906
    %v1908 = vtanh.pop %v1907
    %v1909 = vsub.f32 %v1743, %v1908
    %v1910 = vmul.f32 %v1904, %v1909
    %v1911 = vadd.f32 %v1908, %v1910
    %v1912 = vld [vmem:[%s6] sm:$0xff]
    %v1913 = vld [vmem:[%s6 + $0x8] sm:$0xff]
    %v1914 = vld [vmem:[%s6 + $0x10] sm:$0xff]
    %v1915 = vld [vmem:[%s6 + $0x18] sm:$0xff]
    %v1916 = vld [vmem:[%s6 + $0x20] sm:$0xff]
    %v1917 = vld [vmem:[%s6 + $0x28] sm:$0xff]
    %v1918 = vld [vmem:[%s6 + $0x30] sm:$0xff]
    %v1919 = vld [vmem:[%s6 + $0x38] sm:$0xff]
    %v1920 = vld [vmem:[%s6 + $0x40] sm:$0xff]
    %v1921 = vld [vmem:[%s6 + $0x48] sm:$0xff]
    %v1922 = vld [vmem:[%s6 + $0x50] sm:$0xff]
    %v1923 = vld [vmem:[%s6 + $0x58] sm:$0xff]
    %v1924 = vld [vmem:[%s6 + $0x60] sm:$0xff]
    %v1925 = vld [vmem:[%s6 + $0x68] sm:$0xff]
    %v1926 = vld [vmem:[%s6 + $0x70] sm:$0xff]
    %v1927 = vld [vmem:[%s6 + $0x78] sm:$0xff]
    %v1928 = vld [vmem:[%s7] sm:$0x1]
    %v1930 = vlaneseq
    %v1931 = vshrl.u32 %v1930, 7
    %v1932 = vsub.s32 0, %v1931
    %v1933 = vrot.slane %v1928, %v1932
    %1935 = vmatprep.subr.mxu0 0.0
    %1936 = vmatpush1.msra.mxu0 %v1912
    %1937 = vmatprep.subr.mxu0 0.0
    %1938 = vmatpush1.msra.mxu0 %v1913
    %1939 = vmatprep.subr.mxu0 0.0
    %1940 = vmatpush1.msra.mxu0 %v1914
    %1941 = vmatprep.subr.mxu0 0.0
    %1942 = vmatpush1.msra.mxu0 %v1915
    %1943 = vmatprep.subr.mxu0 0.0
    %1944 = vmatpush1.msra.mxu0 %v1916
    %1945 = vmatprep.subr.mxu0 0.0
    %1946 = vmatpush1.msra.mxu0 %v1917
    %1947 = vmatprep.subr.mxu0 0.0
    %1948 = vmatpush1.msra.mxu0 %v1918
    %1949 = vmatprep.subr.mxu0 0.0
    %1950 = vmatpush1.msra.mxu0 %v1919
    %1951 = vmatprep.subr.mxu0 0.0
    %1952 = vmatpush1.msra.mxu0 %v1920
    %1953 = vmatprep.subr.mxu0 0.0
    %1954 = vmatpush1.msra.mxu0 %v1921
    %1955 = vmatprep.subr.mxu0 0.0
    %1956 = vmatpush1.msra.mxu0 %v1922
    %1957 = vmatprep.subr.mxu0 0.0
    %1958 = vmatpush1.msra.mxu0 %v1923
    %1959 = vmatprep.subr.mxu0 0.0
    %1960 = vmatpush1.msra.mxu0 %v1924
    %1961 = vmatprep.subr.mxu0 0.0
    %1962 = vmatpush1.msra.mxu0 %v1925
    %1963 = vmatprep.subr.mxu0 0.0
    %1964 = vmatpush1.msra.mxu0 %v1926
    %1965 = vmatprep.subr.mxu0 0.0
    %1966 = vmatpush1.msra.mxu0 %v1927
    %1967 = vmatprep.subr.mxu0 0.0
    %1968 = vmatpush1.msra.mxu0 0.0
    %1969 = vmatprep.subr.mxu0 0.0
    %1970 = vmatpush1.msra.mxu0 0.0
    %1971 = vmatprep.subr.mxu0 0.0
    %1972 = vmatpush1.msra.mxu0 0.0
    %1973 = vmatprep.subr.mxu0 0.0
    %1974 = vmatpush1.msra.mxu0 0.0
    %1975 = vmatprep.subr.mxu0 0.0
    %1976 = vmatpush1.msra.mxu0 0.0
    %1977 = vmatprep.subr.mxu0 0.0
    %1978 = vmatpush1.msra.mxu0 0.0
    %1979 = vmatprep.subr.mxu0 0.0
    %1980 = vmatpush1.msra.mxu0 0.0
    %1981 = vmatprep.subr.mxu0 0.0
    %1982 = vmatpush1.msra.mxu0 0.0
    %1983 = vmatprep.subr.mxu0 0.0
    %1984 = vmatpush1.msra.mxu0 0.0
    %1985 = vmatprep.subr.mxu0 0.0
    %1986 = vmatpush1.msra.mxu0 0.0
    %1987 = vmatprep.subr.mxu0 0.0
    %1988 = vmatpush1.msra.mxu0 0.0
    %1989 = vmatprep.subr.mxu0 0.0
    %1990 = vmatpush1.msra.mxu0 0.0
    %1991 = vmatprep.subr.mxu0 0.0
    %1992 = vmatpush1.msra.mxu0 0.0
    %1993 = vmatprep.subr.mxu0 0.0
    %1994 = vmatpush1.msra.mxu0 0.0
    %1995 = vmatprep.subr.mxu0 0.0
    %1996 = vmatpush1.msra.mxu0 0.0
    %1997 = vmatprep.subr.mxu0 0.0
    %1998 = vmatpush1.msra.mxu0 0.0
    %1999 = vmatprep.mubr.f32.mxu0 0.0
    %2000 = vmatmul.mubr.f32.gmra.mrb[0].mxu0 %v1911
    %v2001 = vpop.f32.mrb[0].mxu0
    %v2002 = vadd.f32 %v1933, %v2001
    %v2003 = vpop.f32.mrb[0].mxu0
    %2004 = vdwg.mxu0
    %2005 = vst [vmem:[#allocation6] sm:$0xff] %v2002
    // Predicated region
    $region38: #{tpu_custom_call.1} parent=1 // pred_check
      _
    $region39: #{tpu_custom_call.1} parent=1 // pred_check_branch
      %2007 = sbr.rel (0) target = $region41
    $region40: #{tpu_custom_call.1} parent=1 // pred_region
      %s2009 = ssub.s32 128, 128
      %2010 = vsyncadd [#allocation5], %s2009
      %s2012 = sshll.u32 [#allocation6], 4
      %s2013 = int_to_ptr.vmem [resolvable:$true] %s2012
      %2015 = dma.vmem_to_hbm [thread:$0]  %s2013, 128, %s8, [#allocation5]
    $region41: #{tpu_custom_call.1} parent=1 // pred_fallthru
      _
    // Predicated region
    $region42: #{tpu_custom_call.1} parent=1 // pred_check
      _
    $region43: #{tpu_custom_call.1} parent=1 // pred_check_branch
      %2017 = sbr.rel (0) target = $region45
    $region44: #{tpu_custom_call.1} parent=1 // pred_region
      %2018 = dma.done [#allocation5], 128
    $region45: #{tpu_custom_call.1} parent=1 // pred_fallthru
      _
    %2019 = vsyncpa [#allocation4], 1
    %2020 = vsyncpa [#allocation5], 1

</llo_original>
